<compile_context>
chip_gen: v6e
topology: v6e:2x2x1
jax: 0.10.0
libtpu: 0.0.40
codegen_flags: <defaults>
</compile_context>

<pallas_src>
import jax
import jax.numpy as jnp
from jax import lax
from jax.experimental import pallas as pl
from jax.experimental.pallas import tpu as pltpu


# ----------------------------------------------------------------------------
# Pallas kernel: fused per-point conv1..conv4 (+ReLU) chain, channels-first
# ----------------------------------------------------------------------------
def _backbone_mlp_kernel(x_ref, w1_ref, w2_ref, w3_ref, w4_ref, o_ref):
    # x_ref : (Cin_pad, tile_p) bf16  — channels on sublanes, points on lanes
    # w*_ref: (Cout, Cin)       bf16  — pre-transposed center-tap weights
    # o_ref : (256, tile_p)     bf16  — emitted pre-transposed, lane-dense
    h = jnp.dot(w1_ref[...], x_ref[...], preferred_element_type=jnp.float32)
    h = jnp.maximum(h, 0.0).astype(jnp.bfloat16)
    h = jnp.dot(w2_ref[...], h, preferred_element_type=jnp.float32)
    h = jnp.maximum(h, 0.0).astype(jnp.bfloat16)
    h = jnp.dot(w3_ref[...], h, preferred_element_type=jnp.float32)
    h = jnp.maximum(h, 0.0).astype(jnp.bfloat16)
    h = jnp.dot(w4_ref[...], h, preferred_element_type=jnp.float32)
    h = jnp.maximum(h, 0.0)
    o_ref[...] = h.astype(o_ref.dtype)


def _pick_tile_p(M, B, max_tile=2048):
    """Largest divisor of M that is <= max_tile and lane-legal (multiple of
    128, or == M), preferring an even total grid (v7x has 2 TensorCores) and
    power-of-two tiles.  Capped at 2048 so the working set stays well inside
    the 32 MiB scoped-VMEM default on v7x (64 MiB physical)."""
    best, best_key = None, None
    for t in range(min(max_tile, M), 0, -1):
        if M % t != 0:
            continue
        if t % 128 != 0 and t != M:
            continue
        grid = B * (M // t)
        key = (grid % 2 == 0, (t & (t - 1)) == 0, t)
        if best_key is None or key > best_key:
            best_key, best = key, t
    return best if best is not None else M


def backbone_mlp(feats_T, w1t, w2t, w3t, w4t, *, out_dtype=jnp.bfloat16,
                 max_tile_p=2048):
    """feats_T: (B, Cin_pad, M) bf16 -> (B, 256, M) out_dtype via a fused
    4-layer matmul+ReLU Pallas kernel (bf16 MXU compute, f32 accumulation).
    The output is emitted channels-first so no XLA transpose feeds top_k and
    the writeback is bf16 (half the HBM traffic of the old f32 slab)."""
    B, cin_pad, M = feats_T.shape
    c1, c2, c3, c4 = w1t.shape[0], w2t.shape[0], w3t.shape[0], w4t.shape[0]
    tile_p = _pick_tile_p(M, B, max_tile_p)
    assert M % tile_p == 0
    return pl.pallas_call(
        _backbone_mlp_kernel,
        out_shape=jax.ShapeDtypeStruct((B, c4, M), out_dtype),
        grid_spec=pltpu.PrefetchScalarGridSpec(
            num_scalar_prefetch=0,
            grid=(B, M // tile_p),
            in_specs=[
                # point tile: (Cin_pad, tile_p), batch dim squeezed
                pl.BlockSpec((None, cin_pad, tile_p), lambda b, i: (b, 0, i)),
                # Constant block indices: weights are DMA'd once and stay
                # VMEM-resident across all grid steps (~0.2 MB bf16 total).
                pl.BlockSpec((c1, cin_pad), lambda b, i: (0, 0)),   # W1^T
                pl.BlockSpec((c2, c1), lambda b, i: (0, 0)),        # W2^T
                pl.BlockSpec((c3, c2), lambda b, i: (0, 0)),        # W3^T
                pl.BlockSpec((c4, c3), lambda b, i: (0, 0)),        # W4^T
            ],
            out_specs=pl.BlockSpec((None, c4, tile_p), lambda b, i: (b, 0, i)),
        ),
        compiler_params=pltpu.CompilerParams(
            dimension_semantics=("parallel", "parallel")),
    )(feats_T, w1t, w2t, w3t, w4t)


# ----------------------------------------------------------------------------
# Farthest point sampling (glue, plain JAX) — deterministic start at index 0
# ----------------------------------------------------------------------------
# TODO(synk): the M-step sequential FPS loop (full argmax over N per step)
# dominates end-to-end latency at production shapes; a blocked/Pallas FPS
# would be the next order-of-magnitude win but has no clean expression here.
def _fps_single(coords, num_samples):
    n = coords.shape[0]

    def body(i, state):
        dists, idxs = state
        last = idxs[i - 1]
        d = jnp.sum((coords - coords[last]) ** 2, axis=-1)
        dists = jnp.minimum(dists, d)
        nxt = jnp.argmax(dists).astype(jnp.int32)
        idxs = idxs.at[i].set(nxt)
        return dists, idxs

    dists0 = jnp.full((n,), jnp.inf, dtype=jnp.float32)
    idxs0 = jnp.zeros((num_samples,), dtype=jnp.int32)
    _, idxs = lax.fori_loop(1, num_samples, body, (dists0, idxs0))
    return idxs


# ----------------------------------------------------------------------------
# Module
# ----------------------------------------------------------------------------
class MinkowskiBackbone:
    def __init__(self, input_feature_dim=0, output_num_points=1024 * 8,
                 topk_k=1024, key=None):
        if key is None:
            key = jax.random.PRNGKey(0)
        self.voxel_size = 1e-06
        self.output_feature_dim = 256
        self.output_num_points = output_num_points
        self.topk_k = topk_k

        self.cin = input_feature_dim
        # Pad Cin only to a sublane-friendly multiple of 8 (the old 128-wide
        # zero pad was ~32x wasted layer-1 HBM traffic; MXU is not the
        # bottleneck so a small K is fine).
        self.cin_pad = ((max(input_feature_dim, 1) + 7) // 8) * 8

        dims = [(input_feature_dim, 64), (64, 128), (128, 256), (256, 256)]
        ks = jax.random.split(key, 4)
        kernels = []
        for (ci, co), k in zip(dims, ks):
            # MinkowskiConvolution weight shape: (kernel_volume=3^3, Cin, Cout)
            w = jax.random.normal(k, (27, ci, co), jnp.float32)
            w = w * (1.0 / jnp.sqrt(27.0 * max(ci, 1)))
            kernels.append(w)
        self.kernels = kernels
        # TODO(synk): exact MinkowskiEngine sparse kernel maps (hashed 27-tap
        # neighbourhood gather, stride-2 coordinate downsampling, feature
        # dedup in ME.SparseTensor) have no clean Pallas equivalent; with
        # voxel_size=1e-6 every point is an isolated voxel, so each conv
        # degenerates to the center-tap per-point linear map computed by the
        # Pallas kernel.  Tap 13 assumes ME's default hypercube ordering.
        center = [w[13] for w in kernels]                 # tap (0,0,0) of 3x3x3
        w1 = jnp.pad(center[0],
                     ((0, self.cin_pad - input_feature_dim), (0, 0)))
        # Pre-transpose to (Cout, Cin): the kernel runs the chain transposed
        # so the output comes out channels-first with no in-kernel transpose.
        self.center_weights_T = [
            w1.T.astype(jnp.bfloat16),
            center[1].T.astype(jnp.bfloat16),
            center[2].T.astype(jnp.bfloat16),
            center[3].T.astype(jnp.bfloat16),
        ]
        print(f'Inputfeature: {input_feature_dim}')

    def forward(self, pointcloud, end_points=None):
        if not end_points:
            end_points = {}
        B, N, C = pointcloud.shape
        M = self.output_num_points
        K = self.topk_k
        cin = C - 3

        coords_all = pointcloud[:, :, :3]                       # (B, N, 3)
        # fps per batch, local indices offset by b*N (matches reference code)
        fps_idx = jax.vmap(lambda c: _fps_single(c, M))(coords_all)  # (B, M)
        offsets = (jnp.arange(B, dtype=jnp.int32) * N)[:, None]
        sampled_indices = (fps_idx + offsets).reshape(-1)       # (B*M,)

        coords_flat = coords_all.reshape(-1, 3)
        feats_flat = pointcloud[:, :, 3:].reshape(-1, cin)
        sampled_coords = coords_flat[sampled_indices]           # (B*M, 3)
        sampled_features = feats_flat[sampled_indices]          # (B*M, Cin)

        # Voxelized coordinates (fidelity only; unused by the pointwise
        # approximation of the sparse convs — DCE'd under jit).
        voxel_coords = sampled_coords / self.voxel_size
        batch_indices = jnp.repeat(
            jnp.arange(B, dtype=jnp.float32), M)[:, None]
        _coordinates = jnp.concatenate([batch_indices, voxel_coords], axis=1)
        del _coordinates

        # bf16-cast first (no padded f32 intermediate), pad Cin to a multiple
        # of 8, and put channels on sublanes / points on lanes.
        feats = sampled_features.reshape(B, M, cin).astype(jnp.bfloat16)
        feats = jnp.pad(feats, ((0, 0), (0, 0), (0, self.cin_pad - cin)))
        feats_T = jnp.transpose(feats, (0, 2, 1))               # (B, Cin_pad, M)

        # ---- hot path: conv1..conv4 (+ReLU) fused Pallas kernel ----
        # (B, 256, M) bf16, channels-first: feeds top_k with no XLA transpose.
        xF_T = backbone_mlp(feats_T, *self.center_weights_T)

        # torch.topk(extracted_features, K, dim=1): per (b, channel) top-K
        # over the M sampled points == top_k along the last axis of xF_T.
        # TODO(synk): exact top_k and the per-element gather are plain-JAX
        # glue; approx_max_k / a Pallas streaming top-k would be faster at
        # production shapes but changes exact-reference semantics.  Note bf16
        # activations can flip near-tied top_k indices vs the f32 reference.
        _, idx = lax.top_k(xF_T, K)                             # (B, 256, K)

        # torch.gather(x.F, 0, indices_flat) uses *local* (0..M-1) indices on
        # the flat (B*M, 256) tensor, i.e. it reads batch-0 rows for every
        # batch; preserve that quirk: fp2[b, c, k] = xF_T[0, c, idx[b, c, k]].
        src0 = xF_T[0]                                          # (256, M)
        fp2_features = jax.vmap(
            lambda ib: jnp.take_along_axis(src0, ib, axis=1))(idx)  # (B,256,K)
        fp2_features = fp2_features.astype(jnp.float32)

        reduced_indices = idx[:, 0, :].reshape(-1)              # (B*K,)
        gathered_coords = sampled_coords[reduced_indices].reshape(B, K, 3)

        end_points['fp2_features'] = fp2_features               # (B, 256, K)
        end_points['fp2_xyz'] = gathered_coords
        end_points['fp2_inds'] = jnp.tile(
            jnp.arange(K, dtype=jnp.int32)[None, :], (B, 1))
        return end_points


if __name__ == "__main__":
    key = jax.random.PRNGKey(0)
    k_pc, k_params = jax.random.split(key)

    # Small shapes consistent with the module: B=2, input_feature_dim=4,
    # N input points = 1024, sampled points M = 512 (stands in for 8192),
    # topk K = 128 (stands in for 1024).  Channel dims 64/128/256/256 exact.
    B, N, input_feature_dim = 2, 1024, 4
    M, K = 512, 128

    pointcloud = jax.random.uniform(
        k_pc, (B, N, 3 + input_feature_dim), dtype=jnp.float32)

    model = MinkowskiBackbone(input_feature_dim=input_feature_dim,
                              output_num_points=M, topk_k=K, key=k_params)

    end_points = jax.jit(model.forward)(pointcloud)
    end_points = jax.block_until_ready(end_points)

    assert end_points['fp2_features'].shape == (B, 256, K)
    assert end_points['fp2_features'].dtype == jnp.float32
    assert end_points['fp2_xyz'].shape == (B, K, 3)
    assert end_points['fp2_inds'].shape == (B, K)
    assert bool(jnp.all(jnp.isfinite(end_points['fp2_features'])))

    print("KERNEL_OK")
</pallas_src>

<mosaic_0001>
module attributes {stable_mosaic.version = 11 : i64} {
  func.func @_backbone_mlp_kernel(%arg0: i32, %arg1: i32, %arg2: memref<1x8x512xbf16, #tpu.memory_space<vmem>>, %arg3: memref<64x8xbf16, #tpu.memory_space<vmem>>, %arg4: memref<128x64xbf16, #tpu.memory_space<vmem>>, %arg5: memref<256x128xbf16, #tpu.memory_space<vmem>>, %arg6: memref<256x256xbf16, #tpu.memory_space<vmem>>, %arg7: memref<1x256x512xbf16, #tpu.memory_space<vmem>>) attributes {dimension_semantics = [#tpu.dimension_semantics<parallel>, #tpu.dimension_semantics<parallel>], iteration_bounds = array<i64: 2, 1>, scalar_prefetch = 0 : i64, scratch_operands = 0 : i64, tpu.core_type = #tpu.core_type<tc>, window_params = [{transform_indices = @transform_0, window_bounds = array<i64: 1, 8, 512>}, {pipeline_mode = #tpu.pipeline_mode<synchronous>, transform_indices = @transform_1, window_bounds = array<i64: 64, 8>}, {pipeline_mode = #tpu.pipeline_mode<synchronous>, transform_indices = @transform_2, window_bounds = array<i64: 128, 64>}, {pipeline_mode = #tpu.pipeline_mode<synchronous>, transform_indices = @transform_3, window_bounds = array<i64: 256, 128>}, {pipeline_mode = #tpu.pipeline_mode<synchronous>, transform_indices = @transform_4, window_bounds = array<i64: 256, 256>}, {transform_indices = @transform_5, window_bounds = array<i64: 1, 256, 512>}]} {
    %c0 = arith.constant 0 : index
    %c0_0 = arith.constant 0 : index
    %0 = vector.load %arg3[%c0, %c0_0] : memref<64x8xbf16, #tpu.memory_space<vmem>>, vector<64x8xbf16>
    %c0_1 = arith.constant 0 : index
    %c0_2 = arith.constant 0 : index
    %c0_3 = arith.constant 0 : index
    %1 = vector.load %arg2[%c0_1, %c0_2, %c0_3] : memref<1x8x512xbf16, #tpu.memory_space<vmem>>, vector<1x8x512xbf16>
    %2 = vector.shape_cast %1 : vector<1x8x512xbf16> to vector<8x512xbf16>
    %cst = arith.constant dense<0.000000e+00> : vector<64x512xf32>
    %3 = tpu.matmul %0, %2, %cst {dimension_numbers = #tpu.dot_dimension_numbers<[1], [0], [0], [1], [0, 0, 1, 1], [], []>} : vector<64x8xbf16>, vector<8x512xbf16>, vector<64x512xf32> -> vector<64x512xf32>
    %cst_4 = arith.constant 0.000000e+00 : f32
    %4 = vector.broadcast %cst_4 : f32 to vector<64x512xf32>
    %5 = arith.maximumf %3, %4 : vector<64x512xf32>
    %6 = arith.truncf %5 : vector<64x512xf32> to vector<64x512xbf16>
    %c0_5 = arith.constant 0 : index
    %c0_6 = arith.constant 0 : index
    %7 = vector.load %arg4[%c0_5, %c0_6] : memref<128x64xbf16, #tpu.memory_space<vmem>>, vector<128x64xbf16>
    %cst_7 = arith.constant dense<0.000000e+00> : vector<128x512xf32>
    %8 = tpu.matmul %7, %6, %cst_7 {dimension_numbers = #tpu.dot_dimension_numbers<[1], [0], [0], [1], [0, 0, 1, 1], [], []>} : vector<128x64xbf16>, vector<64x512xbf16>, vector<128x512xf32> -> vector<128x512xf32>
    %cst_8 = arith.constant 0.000000e+00 : f32
    %9 = vector.broadcast %cst_8 : f32 to vector<128x512xf32>
    %10 = arith.maximumf %8, %9 : vector<128x512xf32>
    %11 = arith.truncf %10 : vector<128x512xf32> to vector<128x512xbf16>
    %c0_9 = arith.constant 0 : index
    %c0_10 = arith.constant 0 : index
    %12 = vector.load %arg5[%c0_9, %c0_10] : memref<256x128xbf16, #tpu.memory_space<vmem>>, vector<256x128xbf16>
    %cst_11 = arith.constant dense<0.000000e+00> : vector<256x512xf32>
    %13 = tpu.matmul %12, %11, %cst_11 {dimension_numbers = #tpu.dot_dimension_numbers<[1], [0], [0], [1], [0, 0, 1, 1], [], []>} : vector<256x128xbf16>, vector<128x512xbf16>, vector<256x512xf32> -> vector<256x512xf32>
    %cst_12 = arith.constant 0.000000e+00 : f32
    %14 = vector.broadcast %cst_12 : f32 to vector<256x512xf32>
    %15 = arith.maximumf %13, %14 : vector<256x512xf32>
    %16 = arith.truncf %15 : vector<256x512xf32> to vector<256x512xbf16>
    %c0_13 = arith.constant 0 : index
    %c0_14 = arith.constant 0 : index
    %17 = vector.load %arg6[%c0_13, %c0_14] : memref<256x256xbf16, #tpu.memory_space<vmem>>, vector<256x256xbf16>
    %cst_15 = arith.constant dense<0.000000e+00> : vector<256x512xf32>
    %18 = tpu.matmul %17, %16, %cst_15 {dimension_numbers = #tpu.dot_dimension_numbers<[1], [0], [0], [1], [0, 0, 1, 1], [], []>} : vector<256x256xbf16>, vector<256x512xbf16>, vector<256x512xf32> -> vector<256x512xf32>
    %cst_16 = arith.constant 0.000000e+00 : f32
    %19 = vector.broadcast %cst_16 : f32 to vector<256x512xf32>
    %20 = arith.maximumf %18, %19 : vector<256x512xf32>
    %21 = arith.truncf %20 : vector<256x512xf32> to vector<256x512xbf16>
    %c0_17 = arith.constant 0 : index
    %c0_18 = arith.constant 0 : index
    %c0_19 = arith.constant 0 : index
    %22 = vector.load %arg7[%c0_17, %c0_18, %c0_19] : memref<1x256x512xbf16, #tpu.memory_space<vmem>>, vector<1x256x512xbf16>
    %23 = vector.shape_cast %22 : vector<1x256x512xbf16> to vector<256x512xbf16>
    %24 = vector.shape_cast %21 : vector<256x512xbf16> to vector<1x256x512xbf16>
    tpu.vector_store %arg7[%c0_17, %c0_18, %c0_19], %24 {strides = array<i32>} : memref<1x256x512xbf16, #tpu.memory_space<vmem>>, vector<1x256x512xbf16>,
    return
  }
  func.func @transform_0(%arg0: i32, %arg1: i32) -> (i32, i32, i32) {
    %c0_i32 = arith.constant 0 : i32
    %c0_i32_0 = arith.constant 0 : i32
    return %arg0, %c0_i32, %arg1 : i32, i32, i32
  }
  func.func @transform_1(%arg0: i32, %arg1: i32) -> (i32, i32) {
    %c0_i32 = arith.constant 0 : i32
    %c0_i32_0 = arith.constant 0 : i32
    %c0_i32_1 = arith.constant 0 : i32
    return %c0_i32, %c0_i32_0 : i32, i32
  }
  func.func @transform_2(%arg0: i32, %arg1: i32) -> (i32, i32) {
    %c0_i32 = arith.constant 0 : i32
    %c0_i32_0 = arith.constant 0 : i32
    %c0_i32_1 = arith.constant 0 : i32
    return %c0_i32, %c0_i32_0 : i32, i32
  }
  func.func @transform_3(%arg0: i32, %arg1: i32) -> (i32, i32) {
    %c0_i32 = arith.constant 0 : i32
    %c0_i32_0 = arith.constant 0 : i32
    %c0_i32_1 = arith.constant 0 : i32
    return %c0_i32, %c0_i32_0 : i32, i32
  }
  func.func @transform_4(%arg0: i32, %arg1: i32) -> (i32, i32) {
    %c0_i32 = arith.constant 0 : i32
    %c0_i32_0 = arith.constant 0 : i32
    %c0_i32_1 = arith.constant 0 : i32
    return %c0_i32, %c0_i32_0 : i32, i32
  }
  func.func @transform_5(%arg0: i32, %arg1: i32) -> (i32, i32, i32) {
    %c0_i32 = arith.constant 0 : i32
    %c0_i32_0 = arith.constant 0 : i32
    return %arg0, %c0_i32, %arg1 : i32, i32, i32
  }
}

</mosaic_0001>

<llo_original>
// kernel: custom-call.4
$region0: #{custom-call.4}
  %s0 = inlined_call_operand.vmem [shape: f32[2,1024], index: 0, kind: output, shape index: {}]

// kernel: forward.1
$region0: #{forward.1}
  #allocation0 [shape = 'u32[]', space=smem, size = 0x4, offset = 0x4, fixed_abs, tag = 'smem constant byte address 0x4 - core index']
  #allocation1 [shape = 'u32[144,128]{1,0:T(1,128)}', space=vmem, size = 0x12000, scoped, tag = 'internal scratch']
  %s0 = inlined_call_operand.vmem [shape: bf16[2,8,512], index: 0, kind: input, shape index: {}]
  %s1 = inlined_call_operand.vmem [shape: bf16[64,8], index: 1, kind: input, shape index: {}]
  %s2 = inlined_call_operand.vmem [shape: bf16[128,64], index: 2, kind: input, shape index: {}]
  %s3 = inlined_call_operand.vmem [shape: bf16[256,128], index: 3, kind: input, shape index: {}]
  %s4 = inlined_call_operand.vmem [shape: bf16[256,256], index: 4, kind: input, shape index: {}]
  %s5 = inlined_call_operand.vmem [shape: bf16[2,256,512], index: 5, kind: output, shape index: {}]
  %s6 = sld [smem:[#allocation0]]
  $region53: #{forward.1} parent=0
    _
  %s8 = ssub.s32 1, %s6
  %s9 = scalar_select 0, %s8, %s6
  loop: start=0, step=1, limit=4
  $region2: #{forward.1} parent=0 // loop_pre_header
    _
  $region3: #{forward.1} parent=0 // loop_header
    %s11 = sphi 0, %s15
    %p12 = scmp.ge.s32.totalorder %s11, 4
    %s18 = sphi 0, %s30
    %s19 = sphi 0, %s26
    %s20 = sphi 0, %s18
    %s21 = sphi 0, %s19
    %s22 = sphi 0, %s20
    %s23 = sphi 0, %s21
    %s35 = sphi 0, %s37
    %s38 = sphi 0, %s35
    %s39 = sphi 0, %s38
    %s55 = sphi 0, %s39
    %s59 = sphi 0, %s59
    %s61 = sphi 0, %s59
    %s62 = sphi 0, %s61
    %s76 = sphi 0, %s62
    %s80 = sphi 0, %s80
    %s82 = sphi 0, %s80
    %s83 = sphi 0, %s82
    %s97 = sphi 0, %s83
    %s101 = sphi 0, %s101
    %s103 = sphi 0, %s101
    %s104 = sphi 0, %s103
    %s118 = sphi 0, %s104
    %s122 = sphi 0, %s122
    %s124 = sphi 0, %s122
    %s125 = sphi 0, %s124
    %s139 = sphi 0, %s125
    %s147 = sphi 0, %s149
    %s150 = sphi 0, %s147
    %s151 = sphi 0, %s150
    %s167 = sphi 0, %s151
  $region4: #{forward.1} parent=0 // loop_header_branch
    %14 = sbr.rel (%p12) target = $region8
  $region5: #{forward.1} parent=0 // loop_body
    %s16 = ssub.s32 %s11, 1
    %s17 = ssub.s32 %s11, 2
    %s24 = sadd.s32 1, %s19
    %p25 = scmp.ge.s32.totalorder %s24, 1
    %s26 = scalar_select %p25, 0, %s24
    %s27 = sadd.s32 1, %s18
    %s28 = scalar_select %p25, %s27, %s18
    %p29 = scmp.ge.s32.totalorder %s28, 2
    %s30 = scalar_select %p29, 0, %s28
    %s31 = ssub.s32 %s18, %s30
    %s32 = ssub.s32 %s19, %s26
    %s33 = sor.u32 %s31, %s32
    %p34 = scmp.eq.s32.totalorder %s33, 0
    %s36 = sadd.s32 %s35, 1
    %s37 = scalar_select %p34, %s35, %s36
    %p40 = pneg %p34
    %p41 = scmp.eq.s32.totalorder %s11, 1
    %p42 = por %p40, %p41
    %p43 = scmp.ne.s32.totalorder %s35, %s38
    %p44 = scmp.eq.s32.totalorder %s11, 0
    %p45 = por %p43, %p44
    %p46 = scmp.ne.s32.totalorder %s35, %s38
    %p47 = scmp.eq.s32.totalorder %s16, 1
    %p48 = por %p46, %p47
    %p49 = scmp.ne.s32.totalorder %s38, %s39
    %p50 = scmp.eq.s32.totalorder %s16, 0
    %p51 = por %p49, %p50
    %p52 = scmp.ne.s32.totalorder %s38, %s39
    %p53 = scmp.eq.s32.totalorder %s17, 1
    %p54 = por %p52, %p53
    %p56 = scmp.ne.s32.totalorder %s39, %s55
    %p57 = scmp.eq.s32.totalorder %s17, 0
    %p58 = por %p56, %p57
    %s60 = sadd.s32 %s59, 1
    %p63 = scmp.eq.s32.totalorder %s11, 1
    %p64 = scmp.ne.s32.totalorder %s59, %s61
    %p65 = scmp.eq.s32.totalorder %s11, 0
    %p66 = por %p64, %p65
    %p67 = scmp.ne.s32.totalorder %s59, %s61
    %p68 = scmp.eq.s32.totalorder %s16, 1
    %p69 = por %p67, %p68
    %p70 = scmp.ne.s32.totalorder %s61, %s62
    %p71 = scmp.eq.s32.totalorder %s16, 0
    %p72 = por %p70, %p71
    %p73 = scmp.ne.s32.totalorder %s61, %s62
    %p74 = scmp.eq.s32.totalorder %s17, 1
    %p75 = por %p73, %p74
    %p77 = scmp.ne.s32.totalorder %s62, %s76
    %p78 = scmp.eq.s32.totalorder %s17, 0
    %p79 = por %p77, %p78
    %s81 = sadd.s32 %s80, 1
    %p84 = scmp.eq.s32.totalorder %s11, 1
    %p85 = scmp.ne.s32.totalorder %s80, %s82
    %p86 = scmp.eq.s32.totalorder %s11, 0
    %p87 = por %p85, %p86
    %p88 = scmp.ne.s32.totalorder %s80, %s82
    %p89 = scmp.eq.s32.totalorder %s16, 1
    %p90 = por %p88, %p89
    %p91 = scmp.ne.s32.totalorder %s82, %s83
    %p92 = scmp.eq.s32.totalorder %s16, 0
    %p93 = por %p91, %p92
    %p94 = scmp.ne.s32.totalorder %s82, %s83
    %p95 = scmp.eq.s32.totalorder %s17, 1
    %p96 = por %p94, %p95
    %p98 = scmp.ne.s32.totalorder %s83, %s97
    %p99 = scmp.eq.s32.totalorder %s17, 0
    %p100 = por %p98, %p99
    %s102 = sadd.s32 %s101, 1
    %p105 = scmp.eq.s32.totalorder %s11, 1
    %p106 = scmp.ne.s32.totalorder %s101, %s103
    %p107 = scmp.eq.s32.totalorder %s11, 0
    %p108 = por %p106, %p107
    %p109 = scmp.ne.s32.totalorder %s101, %s103
    %p110 = scmp.eq.s32.totalorder %s16, 1
    %p111 = por %p109, %p110
    %p112 = scmp.ne.s32.totalorder %s103, %s104
    %p113 = scmp.eq.s32.totalorder %s16, 0
    %p114 = por %p112, %p113
    %p115 = scmp.ne.s32.totalorder %s103, %s104
    %p116 = scmp.eq.s32.totalorder %s17, 1
    %p117 = por %p115, %p116
    %p119 = scmp.ne.s32.totalorder %s104, %s118
    %p120 = scmp.eq.s32.totalorder %s17, 0
    %p121 = por %p119, %p120
    %s123 = sadd.s32 %s122, 1
    %p126 = scmp.eq.s32.totalorder %s11, 1
    %p127 = scmp.ne.s32.totalorder %s122, %s124
    %p128 = scmp.eq.s32.totalorder %s11, 0
    %p129 = por %p127, %p128
    %p130 = scmp.ne.s32.totalorder %s122, %s124
    %p131 = scmp.eq.s32.totalorder %s16, 1
    %p132 = por %p130, %p131
    %p133 = scmp.ne.s32.totalorder %s124, %s125
    %p134 = scmp.eq.s32.totalorder %s16, 0
    %p135 = por %p133, %p134
    %p136 = scmp.ne.s32.totalorder %s124, %s125
    %p137 = scmp.eq.s32.totalorder %s17, 1
    %p138 = por %p136, %p137
    %p140 = scmp.ne.s32.totalorder %s125, %s139
    %p141 = scmp.eq.s32.totalorder %s17, 0
    %p142 = por %p140, %p141
    %s143 = ssub.s32 %s18, %s30
    %s144 = ssub.s32 %s19, %s26
    %s145 = sor.u32 %s143, %s144
    %p146 = scmp.eq.s32.totalorder %s145, 0
    %s148 = sadd.s32 %s147, 1
    %s149 = scalar_select %p146, %s147, %s148
    %p152 = pneg %p146
    %p153 = scmp.eq.s32.totalorder %s11, 1
    %p154 = por %p152, %p153
    %p155 = scmp.ne.s32.totalorder %s147, %s150
    %p156 = scmp.eq.s32.totalorder %s11, 0
    %p157 = por %p155, %p156
    %p158 = scmp.ne.s32.totalorder %s147, %s150
    %p159 = scmp.eq.s32.totalorder %s16, 1
    %p160 = por %p158, %p159
    %p161 = scmp.ne.s32.totalorder %s150, %s151
    %p162 = scmp.eq.s32.totalorder %s16, 0
    %p163 = por %p161, %p162
    %p164 = scmp.ne.s32.totalorder %s150, %s151
    %p165 = scmp.eq.s32.totalorder %s17, 1
    %p166 = por %p164, %p165
    %p168 = scmp.ne.s32.totalorder %s151, %s167
    %p169 = scmp.eq.s32.totalorder %s17, 0
    %p170 = por %p168, %p169
    %p171 = scmp.le.s32.totalorder 1, %s11
    %p172 = scmp.lt.s32.totalorder %s11, 3
    %p173 = pnand %p171, %p172
    %p174 = pneg %p173
    // Predicated region
    $region9: #{forward.1} parent=5 // pred_check
      _
    $region10: #{forward.1} parent=5 // pred_check_branch
      %176 = sbr.rel (%p173) target = $region12
    $region11: #{forward.1} parent=5 // pred_region
      %s177 = ssub.s32 %s11, 1
      // Predicated region
      $region13: #{forward.1} parent=11 // pred_check
        %p178 = pneg %p72
      $region14: #{forward.1} parent=11 // pred_check_branch
        %180 = sbr.rel (%p178) target = $region16
      $region15: #{forward.1} parent=11 // pred_region
        _
      $region16: #{forward.1} parent=11 // pred_fallthru
        _
      // Predicated region
      $region17: #{forward.1} parent=11 // pred_check
        %p181 = pneg %p93
      $region18: #{forward.1} parent=11 // pred_check_branch
        %183 = sbr.rel (%p181) target = $region20
      $region19: #{forward.1} parent=11 // pred_region
        _
      $region20: #{forward.1} parent=11 // pred_fallthru
        _
      // Predicated region
      $region21: #{forward.1} parent=11 // pred_check
        %p184 = pneg %p114
      $region22: #{forward.1} parent=11 // pred_check_branch
        %186 = sbr.rel (%p184) target = $region24
      $region23: #{forward.1} parent=11 // pred_region
        _
      $region24: #{forward.1} parent=11 // pred_fallthru
        _
      // Predicated region
      $region25: #{forward.1} parent=11 // pred_check
        %p187 = pneg %p135
      $region26: #{forward.1} parent=11 // pred_check_branch
        %189 = sbr.rel (%p187) target = $region28
      $region27: #{forward.1} parent=11 // pred_region
        _
      $region28: #{forward.1} parent=11 // pred_fallthru
        _
    $region12: #{forward.1} parent=5 // pred_fallthru
      _
    %p190 = scmp.lt.s32.totalorder %s11, 2
    // Predicated region
    $region29: #{forward.1} parent=5 // pred_check
      %p191 = pneg %p190
    $region30: #{forward.1} parent=5 // pred_check_branch
      %193 = sbr.rel (%p191) target = $region32
    $region31: #{forward.1} parent=5 // pred_region
      // Predicated region
      $region33: #{forward.1} parent=31 // pred_check
        %p194 = pneg %p45
      $region34: #{forward.1} parent=31 // pred_check_branch
        %196 = sbr.rel (%p194) target = $region36
      $region35: #{forward.1} parent=31 // pred_region
        %s197 = smul.u32 4, %s19
        %p198 = scmp.lt.s32.totalorder %s18, 1
        %s199 = scalar_select %p198, %s18, 1
        %p200 = scmp.lt.s32.totalorder %s197, 3
        %s201 = scalar_select %p200, %s197, 3
        %s202 = smul.addr %s199, 4
        %s203 = sadd.s32 %s201, %s202
        %s204 = smul.addr %s203, 4
        %s205 = scalar_lea.vmem %s0, %s204
        %s206 = smul.u32 4, %s19
      $region36: #{forward.1} parent=31 // pred_fallthru
        _
    $region32: #{forward.1} parent=5 // pred_fallthru
      _
    %p207 = scmp.le.s32.totalorder 1, %s11
    %p208 = scmp.lt.s32.totalorder %s11, 3
    %p209 = pnand %p207, %p208
    %p210 = pneg %p209
    // Predicated region
    $region37: #{forward.1} parent=5 // pred_check
      _
    $region38: #{forward.1} parent=5 // pred_check_branch
      %212 = sbr.rel (%p209) target = $region40
    $region39: #{forward.1} parent=5 // pred_region
      %s213 = ssub.s32 %s11, 1
      %s214 = smul.u32 4, %s21
      %p215 = scmp.lt.s32.totalorder %s20, 1
      %s216 = scalar_select %p215, %s20, 1
      %p217 = scmp.lt.s32.totalorder %s214, 3
      %s218 = scalar_select %p217, %s214, 3
      %s219 = smul.addr %s216, 4
      %s220 = sadd.s32 %s218, %s219
      %s221 = smul.addr %s220, 4
      %s222 = scalar_lea.vmem %s0, %s221
      %p223 = pneg %p51
      %p224 = pneg %p48
      %p225 = pneg %p72
      %p226 = pneg %p69
      %p227 = pneg %p93
      %p228 = pneg %p90
      %p229 = pneg %p114
      %p230 = pneg %p111
      %p231 = pneg %p135
      %p232 = pneg %p132
      %p233 = pneg %p163
      %p234 = pneg %p160
      %s235 = smul.u32 4, %s21
      %p236 = scmp.lt.s32.totalorder %s20, 1
      %s237 = scalar_select %p236, %s20, 1
      %p238 = scmp.lt.s32.totalorder %s235, 3
      %s239 = scalar_select %p238, %s235, 3
      %s240 = smul.addr %s237, 128
      %s241 = sadd.s32 %s239, %s240
      %s242 = smul.addr %s241, 4
      %s243 = scalar_lea.vmem %s5, %s242
      %s244 = smul.u32 4, %s21
      %p245 = scmp.lt.s32.totalorder %s20, 1
      %s246 = scalar_select %p245, %s20, 1
      %p247 = scmp.lt.s32.totalorder %s244, 3
      %s248 = scalar_select %p247, %s244, 3
      %s249 = smul.addr %s246, 4
      %s250 = sadd.s32 %s248, %s249
      %s251 = smul.addr %s250, 4
      %s252 = scalar_lea.vmem %s0, %s251
      %s253 = smul.u32 4, %s21
      %s254 = smul.u32 4, %s21
      %p255 = scmp.lt.s32.totalorder %s20, 1
      %s256 = scalar_select %p255, %s20, 1
      %p257 = scmp.lt.s32.totalorder %s254, 3
      %s258 = scalar_select %p257, %s254, 3
      %s259 = smul.addr %s256, 128
      %s260 = sadd.s32 %s258, %s259
      %s261 = smul.addr %s260, 4
      %s262 = scalar_lea.vmem %s5, %s261
      %s263 = smul.u32 4, %s21
      %v265 = vld [vmem:[%s1] sm:$0xf]
      %v266 = vld [vmem:[%s1 + $0x4] sm:$0xf]
      %v267 = vld [vmem:[%s1 + $0x8] sm:$0xf]
      %v268 = vld [vmem:[%s1 + $0xc] sm:$0xf]
      %v269 = vld [vmem:[%s1 + $0x10] sm:$0xf]
      %v270 = vld [vmem:[%s1 + $0x14] sm:$0xf]
      %v271 = vld [vmem:[%s1 + $0x18] sm:$0xf]
      %v272 = vld [vmem:[%s1 + $0x1c] sm:$0xf]
      %v273 = vld [vmem:[%s252] sm:$0xff]
      %v274 = vld [vmem:[%s252 + $0x8] sm:$0xff]
      %v283 = vunpack.c.l.b16 %v265
      %v284 = vunpack.c.l.b16 %v266
      %v285 = vunpack.c.l.b16 %v267
      %v286 = vunpack.c.l.b16 %v268
      %v287 = vunpack.c.l.b16 %v269
      %v288 = vunpack.c.l.b16 %v270
      %v289 = vunpack.c.l.b16 %v271
      %v290 = vunpack.c.l.b16 %v272
      %v291 = vpack.c.b16 %v284, %v283
      %v292 = vpack.c.b16 %v286, %v285
      %v293 = vpack.c.b16 %v288, %v287
      %v294 = vpack.c.b16 %v290, %v289
      %v297 = vunpack.c.l.b16 %v273
      %v298 = vunpack.c.h.b16 %v273
      %v299 = vunpack.c.l.b16 %v274
      %v300 = vunpack.c.h.b16 %v274
      %v301 = vpack.c.b16 %v297, %v297
      %v302 = vpack.c.b16 %v298, %v298
      %v303 = vpack.c.b16 %v299, %v299
      %v304 = vpack.c.b16 %v300, %v300
      %vm305 = vcmask 64512
      %v307 = vsel %vm305, %v291, 0
      %v310 = vsel %vm305, %v292, 0
      %v313 = vsel %vm305, %v293, 0
      %v316 = vsel %vm305, %v294, 0
      %vm318 = vcmask 1043456
      %v320 = vsel %vm318, %v301, 0
      %v323 = vsel %vm318, %v302, 0
      %v326 = vsel %vm318, %v303, 0
      %v329 = vsel %vm318, %v304, 0
      %331 = vmatprep.subr.bf16.mxu0 0
      %332 = vmatpush1.bf16.msra.mxu0 0
      %333 = vmatprep.subr.bf16.mxu0 0
      %334 = vmatpush1.bf16.msra.mxu0 0
      %335 = vmatprep.subr.bf16.mxu0 0
      %336 = vmatpush1.bf16.msra.mxu0 0
      %337 = vmatprep.subr.bf16.mxu0 0
      %338 = vmatpush1.bf16.msra.mxu0 0
      %339 = vmatprep.subr.bf16.mxu0 0
      %340 = vmatpush1.bf16.msra.mxu0 0
      %341 = vmatprep.subr.bf16.mxu0 0
      %342 = vmatpush1.bf16.msra.mxu0 0
      %343 = vmatprep.subr.bf16.mxu0 0
      %344 = vmatpush1.bf16.msra.mxu0 0
      %345 = vmatprep.subr.bf16.mxu0 %v323
      %346 = vmatpush1.bf16.msra.mxu0 %v320
      %347 = vmatprep.subr.bf16.mxu0 0
      %348 = vmatpush2.bf16.msra.mxu0 0
      %349 = vmatprep.subr.bf16.mxu0 0
      %350 = vmatpush2.bf16.msra.mxu0 0
      %351 = vmatprep.subr.bf16.mxu0 0
      %352 = vmatpush2.bf16.msra.mxu0 0
      %353 = vmatprep.subr.bf16.mxu0 0
      %354 = vmatpush2.bf16.msra.mxu0 0
      %355 = vmatprep.subr.bf16.mxu0 0
      %356 = vmatpush2.bf16.msra.mxu0 0
      %357 = vmatprep.subr.bf16.mxu0 0
      %358 = vmatpush2.bf16.msra.mxu0 0
      %359 = vmatprep.subr.bf16.mxu0 0
      %360 = vmatpush2.bf16.msra.mxu0 0
      %361 = vmatprep.subr.bf16.mxu0 0
      %362 = vmatpush2.bf16.msra.mxu0 0
      %363 = vmatprep.mubr.bf16.mxu0 0
      %364 = vmatmul.mubr.bf16.gmra.mxu0 %v307
      %v365 = vpop.f32.mrf.mxu0
      %v366 = vadd.f32 0.0, %v365
      %v367 = vpop.f32.mrf.mxu0
      %v368 = vadd.f32 0.0, %v367
      %v369 = vpop.f32.mrf.mxu0
      %v370 = vadd.f32 0.0, %v369
      %v371 = vpop.f32.mrf.mxu0
      %v372 = vadd.f32 0.0, %v371
      %373 = vmatprep.mubr.bf16.mxu0 0
      %374 = vmatmul.mubr.bf16.gmra.mxu0 %v310
      %v375 = vpop.f32.mrf.mxu0
      %v376 = vadd.f32 0.0, %v375
      %v377 = vpop.f32.mrf.mxu0
      %v378 = vadd.f32 0.0, %v377
      %v379 = vpop.f32.mrf.mxu0
      %v380 = vadd.f32 0.0, %v379
      %v381 = vpop.f32.mrf.mxu0
      %v382 = vadd.f32 0.0, %v381
      %383 = vmatprep.mubr.bf16.mxu0 0
      %384 = vmatmul.mubr.bf16.gmra.mxu0 %v313
      %v385 = vpop.f32.mrf.mxu0
      %v386 = vadd.f32 0.0, %v385
      %v387 = vpop.f32.mrf.mxu0
      %v388 = vadd.f32 0.0, %v387
      %v389 = vpop.f32.mrf.mxu0
      %v390 = vadd.f32 0.0, %v389
      %v391 = vpop.f32.mrf.mxu0
      %v392 = vadd.f32 0.0, %v391
      %393 = vmatprep.mubr.bf16.mxu0 0
      %394 = vmatmul.mubr.bf16.gmra.mxu0 %v316
      %v395 = vpop.f32.mrf.mxu0
      %v396 = vadd.f32 0.0, %v395
      %v397 = vpop.f32.mrf.mxu0
      %v398 = vadd.f32 0.0, %v397
      %v399 = vpop.f32.mrf.mxu0
      %v400 = vadd.f32 0.0, %v399
      %v401 = vpop.f32.mrf.mxu0
      %v402 = vadd.f32 0.0, %v401
      %403 = vdwg.mxu0
      %404 = vmatprep.subr.bf16.mxu0 0
      %405 = vmatpush1.bf16.msra.mxu0 0
      %406 = vmatprep.subr.bf16.mxu0 0
      %407 = vmatpush1.bf16.msra.mxu0 0
      %408 = vmatprep.subr.bf16.mxu0 0
      %409 = vmatpush1.bf16.msra.mxu0 0
      %410 = vmatprep.subr.bf16.mxu0 0
      %411 = vmatpush1.bf16.msra.mxu0 0
      %412 = vmatprep.subr.bf16.mxu0 0
      %413 = vmatpush1.bf16.msra.mxu0 0
      %414 = vmatprep.subr.bf16.mxu0 0
      %415 = vmatpush1.bf16.msra.mxu0 0
      %416 = vmatprep.subr.bf16.mxu0 0
      %417 = vmatpush1.bf16.msra.mxu0 0
      %418 = vmatprep.subr.bf16.mxu0 %v329
      %419 = vmatpush1.bf16.msra.mxu0 %v326
      %420 = vmatprep.subr.bf16.mxu0 0
      %421 = vmatpush2.bf16.msra.mxu0 0
      %422 = vmatprep.subr.bf16.mxu0 0
      %423 = vmatpush2.bf16.msra.mxu0 0
      %424 = vmatprep.subr.bf16.mxu0 0
      %425 = vmatpush2.bf16.msra.mxu0 0
      %426 = vmatprep.subr.bf16.mxu0 0
      %427 = vmatpush2.bf16.msra.mxu0 0
      %428 = vmatprep.subr.bf16.mxu0 0
      %429 = vmatpush2.bf16.msra.mxu0 0
      %430 = vmatprep.subr.bf16.mxu0 0
      %431 = vmatpush2.bf16.msra.mxu0 0
      %432 = vmatprep.subr.bf16.mxu0 0
      %433 = vmatpush2.bf16.msra.mxu0 0
      %434 = vmatprep.subr.bf16.mxu0 0
      %435 = vmatpush2.bf16.msra.mxu0 0
      %436 = vmatprep.mubr.bf16.mxu0 0
      %437 = vmatmul.mubr.bf16.gmra.mxu0 %v307
      %v438 = vpop.f32.mrf.mxu0
      %v439 = vadd.f32 0.0, %v438
      %v440 = vpop.f32.mrf.mxu0
      %v441 = vadd.f32 0.0, %v440
      %v442 = vpop.f32.mrf.mxu0
      %v443 = vadd.f32 0.0, %v442
      %v444 = vpop.f32.mrf.mxu0
      %v445 = vadd.f32 0.0, %v444
      %446 = vmatprep.mubr.bf16.mxu0 0
      %447 = vmatmul.mubr.bf16.gmra.mxu0 %v310
      %v448 = vpop.f32.mrf.mxu0
      %v449 = vadd.f32 0.0, %v448
      %v450 = vpop.f32.mrf.mxu0
      %v451 = vadd.f32 0.0, %v450
      %v452 = vpop.f32.mrf.mxu0
      %v453 = vadd.f32 0.0, %v452
      %v454 = vpop.f32.mrf.mxu0
      %v455 = vadd.f32 0.0, %v454
      %456 = vmatprep.mubr.bf16.mxu0 0
      %457 = vmatmul.mubr.bf16.gmra.mxu0 %v313
      %v458 = vpop.f32.mrf.mxu0
      %v459 = vadd.f32 0.0, %v458
      %v460 = vpop.f32.mrf.mxu0
      %v461 = vadd.f32 0.0, %v460
      %v462 = vpop.f32.mrf.mxu0
      %v463 = vadd.f32 0.0, %v462
      %v464 = vpop.f32.mrf.mxu0
      %v465 = vadd.f32 0.0, %v464
      %466 = vmatprep.mubr.bf16.mxu0 0
      %467 = vmatmul.mubr.bf16.gmra.mxu0 %v316
      %v468 = vpop.f32.mrf.mxu0
      %v469 = vadd.f32 0.0, %v468
      %v470 = vpop.f32.mrf.mxu0
      %v471 = vadd.f32 0.0, %v470
      %v472 = vpop.f32.mrf.mxu0
      %v473 = vadd.f32 0.0, %v472
      %v474 = vpop.f32.mrf.mxu0
      %v475 = vadd.f32 0.0, %v474
      %476 = vdwg.mxu0
      %v477 = vmax.f32 %v366, 0.0
      %v478 = vmax.f32 %v368, 0.0
      %v479 = vmax.f32 %v439, 0.0
      %v480 = vmax.f32 %v441, 0.0
      %v481 = vmax.f32 %v370, 0.0
      %v482 = vmax.f32 %v372, 0.0
      %v483 = vmax.f32 %v443, 0.0
      %v484 = vmax.f32 %v445, 0.0
      %v485 = vmax.f32 %v376, 0.0
      %v486 = vmax.f32 %v378, 0.0
      %v487 = vmax.f32 %v449, 0.0
      %v488 = vmax.f32 %v451, 0.0
      %v489 = vmax.f32 %v380, 0.0
      %v490 = vmax.f32 %v382, 0.0
      %v491 = vmax.f32 %v453, 0.0
      %v492 = vmax.f32 %v455, 0.0
      %v493 = vmax.f32 %v386, 0.0
      %v494 = vmax.f32 %v388, 0.0
      %v495 = vmax.f32 %v459, 0.0
      %v496 = vmax.f32 %v461, 0.0
      %v497 = vmax.f32 %v390, 0.0
      %v498 = vmax.f32 %v392, 0.0
      %v499 = vmax.f32 %v463, 0.0
      %v500 = vmax.f32 %v465, 0.0
      %v501 = vmax.f32 %v396, 0.0
      %v502 = vmax.f32 %v398, 0.0
      %v503 = vmax.f32 %v469, 0.0
      %v504 = vmax.f32 %v471, 0.0
      %v505 = vmax.f32 %v400, 0.0
      %v506 = vmax.f32 %v402, 0.0
      %v507 = vmax.f32 %v473, 0.0
      %v508 = vmax.f32 %v475, 0.0
      %v509 = vpack.c.bf16 %v481, %v477
      %v510 = vpack.c.bf16 %v482, %v478
      %v511 = vpack.c.bf16 %v483, %v479
      %v512 = vpack.c.bf16 %v484, %v480
      %v513 = vpack.c.bf16 %v489, %v485
      %v514 = vpack.c.bf16 %v490, %v486
      %v515 = vpack.c.bf16 %v491, %v487
      %v516 = vpack.c.bf16 %v492, %v488
      %v517 = vpack.c.bf16 %v497, %v493
      %v518 = vpack.c.bf16 %v498, %v494
      %v519 = vpack.c.bf16 %v499, %v495
      %v520 = vpack.c.bf16 %v500, %v496
      %v521 = vpack.c.bf16 %v505, %v501
      %v522 = vpack.c.bf16 %v506, %v502
      %v523 = vpack.c.bf16 %v507, %v503
      %v524 = vpack.c.bf16 %v508, %v504
      %v525 = vld [vmem:[%s2] sm:$0xf]
      %v526 = vld [vmem:[%s2 + $0x4] sm:$0xf]
      %v527 = vld [vmem:[%s2 + $0x8] sm:$0xf]
      %v528 = vld [vmem:[%s2 + $0xc] sm:$0xf]
      %v529 = vld [vmem:[%s2 + $0x10] sm:$0xf]
      %v530 = vld [vmem:[%s2 + $0x14] sm:$0xf]
      %v531 = vld [vmem:[%s2 + $0x18] sm:$0xf]
      %v532 = vld [vmem:[%s2 + $0x1c] sm:$0xf]
      %v533 = vld [vmem:[%s2 + $0x20] sm:$0xf]
      %v534 = vld [vmem:[%s2 + $0x24] sm:$0xf]
      %v535 = vld [vmem:[%s2 + $0x28] sm:$0xf]
      %v536 = vld [vmem:[%s2 + $0x2c] sm:$0xf]
      %v537 = vld [vmem:[%s2 + $0x30] sm:$0xf]
      %v538 = vld [vmem:[%s2 + $0x34] sm:$0xf]
      %v539 = vld [vmem:[%s2 + $0x38] sm:$0xf]
      %v540 = vld [vmem:[%s2 + $0x3c] sm:$0xf]
      %v557 = vunpack.c.l.b16 %v525
      %v558 = vunpack.c.l.b16 %v526
      %v559 = vunpack.c.l.b16 %v527
      %v560 = vunpack.c.l.b16 %v528
      %v561 = vunpack.c.l.b16 %v529
      %v562 = vunpack.c.l.b16 %v530
      %v563 = vunpack.c.l.b16 %v531
      %v564 = vunpack.c.l.b16 %v532
      %v565 = vunpack.c.l.b16 %v533
      %v566 = vunpack.c.l.b16 %v534
      %v567 = vunpack.c.l.b16 %v535
      %v568 = vunpack.c.l.b16 %v536
      %v569 = vunpack.c.l.b16 %v537
      %v570 = vunpack.c.l.b16 %v538
      %v571 = vunpack.c.l.b16 %v539
      %v572 = vunpack.c.l.b16 %v540
      %v573 = vpack.c.b16 %v558, %v557
      %v574 = vpack.c.b16 %v560, %v559
      %v575 = vpack.c.b16 %v562, %v561
      %v576 = vpack.c.b16 %v564, %v563
      %v577 = vpack.c.b16 %v566, %v565
      %v578 = vpack.c.b16 %v568, %v567
      %v579 = vpack.c.b16 %v570, %v569
      %v580 = vpack.c.b16 %v572, %v571
      %vm581 = vcmask 523264
      %v583 = vsel %vm581, %v573, 0
      %v586 = vsel %vm581, %v574, 0
      %v589 = vsel %vm581, %v575, 0
      %v592 = vsel %vm581, %v576, 0
      %v595 = vsel %vm581, %v577, 0
      %v598 = vsel %vm581, %v578, 0
      %v601 = vsel %vm581, %v579, 0
      %v604 = vsel %vm581, %v580, 0
      %606 = vmatprep.subr.bf16.mxu0 0
      %607 = vmatpush1.bf16.msra.mxu0 0
      %608 = vmatprep.subr.bf16.mxu0 0
      %609 = vmatpush1.bf16.msra.mxu0 0
      %610 = vmatprep.subr.bf16.mxu0 0
      %611 = vmatpush1.bf16.msra.mxu0 0
      %612 = vmatprep.subr.bf16.mxu0 0
      %613 = vmatpush1.bf16.msra.mxu0 0
      %614 = vmatprep.subr.bf16.mxu0 %v522
      %615 = vmatpush1.bf16.msra.mxu0 %v521
      %616 = vmatprep.subr.bf16.mxu0 %v518
      %617 = vmatpush1.bf16.msra.mxu0 %v517
      %618 = vmatprep.subr.bf16.mxu0 %v514
      %619 = vmatpush1.bf16.msra.mxu0 %v513
      %620 = vmatprep.subr.bf16.mxu0 %v510
      %621 = vmatpush1.bf16.msra.mxu0 %v509
      %622 = vmatprep.subr.bf16.mxu0 0
      %623 = vmatpush2.bf16.msra.mxu0 0
      %624 = vmatprep.subr.bf16.mxu0 0
      %625 = vmatpush2.bf16.msra.mxu0 0
      %626 = vmatprep.subr.bf16.mxu0 0
      %627 = vmatpush2.bf16.msra.mxu0 0
      %628 = vmatprep.subr.bf16.mxu0 0
      %629 = vmatpush2.bf16.msra.mxu0 0
      %630 = vmatprep.subr.bf16.mxu0 0
      %631 = vmatpush2.bf16.msra.mxu0 0
      %632 = vmatprep.subr.bf16.mxu0 0
      %633 = vmatpush2.bf16.msra.mxu0 0
      %634 = vmatprep.subr.bf16.mxu0 0
      %635 = vmatpush2.bf16.msra.mxu0 0
      %636 = vmatprep.subr.bf16.mxu0 0
      %637 = vmatpush2.bf16.msra.mxu0 0
      %638 = vmatprep.mubr.bf16.mxu0 0
      %639 = vmatmul.mubr.bf16.gmra.mxu0 %v583
      %v640 = vpop.f32.mrf.mxu0
      %v641 = vadd.f32 0.0, %v640
      %v642 = vpop.f32.mrf.mxu0
      %v643 = vadd.f32 0.0, %v642
      %v644 = vpop.f32.mrf.mxu0
      %v645 = vadd.f32 0.0, %v644
      %v646 = vpop.f32.mrf.mxu0
      %v647 = vadd.f32 0.0, %v646
      %648 = vmatprep.mubr.bf16.mxu0 0
      %649 = vmatmul.mubr.bf16.gmra.mxu0 %v586
      %v650 = vpop.f32.mrf.mxu0
      %v651 = vadd.f32 0.0, %v650
      %v652 = vpop.f32.mrf.mxu0
      %v653 = vadd.f32 0.0, %v652
      %v654 = vpop.f32.mrf.mxu0
      %v655 = vadd.f32 0.0, %v654
      %v656 = vpop.f32.mrf.mxu0
      %v657 = vadd.f32 0.0, %v656
      %658 = vmatprep.mubr.bf16.mxu0 0
      %659 = vmatmul.mubr.bf16.gmra.mxu0 %v589
      %v660 = vpop.f32.mrf.mxu0
      %v661 = vadd.f32 0.0, %v660
      %v662 = vpop.f32.mrf.mxu0
      %v663 = vadd.f32 0.0, %v662
      %v664 = vpop.f32.mrf.mxu0
      %v665 = vadd.f32 0.0, %v664
      %v666 = vpop.f32.mrf.mxu0
      %v667 = vadd.f32 0.0, %v666
      %668 = vmatprep.mubr.bf16.mxu0 0
      %669 = vmatmul.mubr.bf16.gmra.mxu0 %v592
      %v670 = vpop.f32.mrf.mxu0
      %v671 = vadd.f32 0.0, %v670
      %v672 = vpop.f32.mrf.mxu0
      %v673 = vadd.f32 0.0, %v672
      %v674 = vpop.f32.mrf.mxu0
      %v675 = vadd.f32 0.0, %v674
      %v676 = vpop.f32.mrf.mxu0
      %v677 = vadd.f32 0.0, %v676
      %678 = vmatprep.mubr.bf16.mxu0 0
      %679 = vmatmul.mubr.bf16.gmra.mxu0 %v595
      %v680 = vpop.f32.mrf.mxu0
      %v681 = vadd.f32 0.0, %v680
      %v682 = vpop.f32.mrf.mxu0
      %v683 = vadd.f32 0.0, %v682
      %v684 = vpop.f32.mrf.mxu0
      %v685 = vadd.f32 0.0, %v684
      %v686 = vpop.f32.mrf.mxu0
      %v687 = vadd.f32 0.0, %v686
      %688 = vmatprep.mubr.bf16.mxu0 0
      %689 = vmatmul.mubr.bf16.gmra.mxu0 %v598
      %v690 = vpop.f32.mrf.mxu0
      %v691 = vadd.f32 0.0, %v690
      %v692 = vpop.f32.mrf.mxu0
      %v693 = vadd.f32 0.0, %v692
      %v694 = vpop.f32.mrf.mxu0
      %v695 = vadd.f32 0.0, %v694
      %v696 = vpop.f32.mrf.mxu0
      %v697 = vadd.f32 0.0, %v696
      %698 = vmatprep.mubr.bf16.mxu0 0
      %699 = vmatmul.mubr.bf16.gmra.mxu0 %v601
      %v700 = vpop.f32.mrf.mxu0
      %v701 = vadd.f32 0.0, %v700
      %v702 = vpop.f32.mrf.mxu0
      %v703 = vadd.f32 0.0, %v702
      %v704 = vpop.f32.mrf.mxu0
      %v705 = vadd.f32 0.0, %v704
      %v706 = vpop.f32.mrf.mxu0
      %v707 = vadd.f32 0.0, %v706
      %708 = vmatprep.mubr.bf16.mxu0 0
      %709 = vmatmul.mubr.bf16.gmra.mxu0 %v604
      %v710 = vpop.f32.mrf.mxu0
      %v711 = vadd.f32 0.0, %v710
      %v712 = vpop.f32.mrf.mxu0
      %v713 = vadd.f32 0.0, %v712
      %v714 = vpop.f32.mrf.mxu0
      %v715 = vadd.f32 0.0, %v714
      %v716 = vpop.f32.mrf.mxu0
      %v717 = vadd.f32 0.0, %v716
      %718 = vdwg.mxu0
      %719 = vmatprep.subr.bf16.mxu0 0
      %720 = vmatpush1.bf16.msra.mxu0 0
      %721 = vmatprep.subr.bf16.mxu0 0
      %722 = vmatpush1.bf16.msra.mxu0 0
      %723 = vmatprep.subr.bf16.mxu0 0
      %724 = vmatpush1.bf16.msra.mxu0 0
      %725 = vmatprep.subr.bf16.mxu0 0
      %726 = vmatpush1.bf16.msra.mxu0 0
      %727 = vmatprep.subr.bf16.mxu0 %v524
      %728 = vmatpush1.bf16.msra.mxu0 %v523
      %729 = vmatprep.subr.bf16.mxu0 %v520
      %730 = vmatpush1.bf16.msra.mxu0 %v519
      %731 = vmatprep.subr.bf16.mxu0 %v516
      %732 = vmatpush1.bf16.msra.mxu0 %v515
      %733 = vmatprep.subr.bf16.mxu0 %v512
      %734 = vmatpush1.bf16.msra.mxu0 %v511
      %735 = vmatprep.subr.bf16.mxu0 0
      %736 = vmatpush2.bf16.msra.mxu0 0
      %737 = vmatprep.subr.bf16.mxu0 0
      %738 = vmatpush2.bf16.msra.mxu0 0
      %739 = vmatprep.subr.bf16.mxu0 0
      %740 = vmatpush2.bf16.msra.mxu0 0
      %741 = vmatprep.subr.bf16.mxu0 0
      %742 = vmatpush2.bf16.msra.mxu0 0
      %743 = vmatprep.subr.bf16.mxu0 0
      %744 = vmatpush2.bf16.msra.mxu0 0
      %745 = vmatprep.subr.bf16.mxu0 0
      %746 = vmatpush2.bf16.msra.mxu0 0
      %747 = vmatprep.subr.bf16.mxu0 0
      %748 = vmatpush2.bf16.msra.mxu0 0
      %749 = vmatprep.subr.bf16.mxu0 0
      %750 = vmatpush2.bf16.msra.mxu0 0
      %751 = vmatprep.mubr.bf16.mxu0 0
      %752 = vmatmul.mubr.bf16.gmra.mxu0 %v583
      %v753 = vpop.f32.mrf.mxu0
      %v754 = vadd.f32 0.0, %v753
      %v755 = vpop.f32.mrf.mxu0
      %v756 = vadd.f32 0.0, %v755
      %v757 = vpop.f32.mrf.mxu0
      %v758 = vadd.f32 0.0, %v757
      %v759 = vpop.f32.mrf.mxu0
      %v760 = vadd.f32 0.0, %v759
      %761 = vmatprep.mubr.bf16.mxu0 0
      %762 = vmatmul.mubr.bf16.gmra.mxu0 %v586
      %v763 = vpop.f32.mrf.mxu0
      %v764 = vadd.f32 0.0, %v763
      %v765 = vpop.f32.mrf.mxu0
      %v766 = vadd.f32 0.0, %v765
      %v767 = vpop.f32.mrf.mxu0
      %v768 = vadd.f32 0.0, %v767
      %v769 = vpop.f32.mrf.mxu0
      %v770 = vadd.f32 0.0, %v769
      %771 = vmatprep.mubr.bf16.mxu0 0
      %772 = vmatmul.mubr.bf16.gmra.mxu0 %v589
      %v773 = vpop.f32.mrf.mxu0
      %v774 = vadd.f32 0.0, %v773
      %v775 = vpop.f32.mrf.mxu0
      %v776 = vadd.f32 0.0, %v775
      %v777 = vpop.f32.mrf.mxu0
      %v778 = vadd.f32 0.0, %v777
      %v779 = vpop.f32.mrf.mxu0
      %v780 = vadd.f32 0.0, %v779
      %781 = vmatprep.mubr.bf16.mxu0 0
      %782 = vmatmul.mubr.bf16.gmra.mxu0 %v592
      %v783 = vpop.f32.mrf.mxu0
      %v784 = vadd.f32 0.0, %v783
      %v785 = vpop.f32.mrf.mxu0
      %v786 = vadd.f32 0.0, %v785
      %v787 = vpop.f32.mrf.mxu0
      %v788 = vadd.f32 0.0, %v787
      %v789 = vpop.f32.mrf.mxu0
      %v790 = vadd.f32 0.0, %v789
      %791 = vmatprep.mubr.bf16.mxu0 0
      %792 = vmatmul.mubr.bf16.gmra.mxu0 %v595
      %v793 = vpop.f32.mrf.mxu0
      %v794 = vadd.f32 0.0, %v793
      %v795 = vpop.f32.mrf.mxu0
      %v796 = vadd.f32 0.0, %v795
      %v797 = vpop.f32.mrf.mxu0
      %v798 = vadd.f32 0.0, %v797
      %v799 = vpop.f32.mrf.mxu0
      %v800 = vadd.f32 0.0, %v799
      %801 = vmatprep.mubr.bf16.mxu0 0
      %802 = vmatmul.mubr.bf16.gmra.mxu0 %v598
      %v803 = vpop.f32.mrf.mxu0
      %v804 = vadd.f32 0.0, %v803
      %v805 = vpop.f32.mrf.mxu0
      %v806 = vadd.f32 0.0, %v805
      %v807 = vpop.f32.mrf.mxu0
      %v808 = vadd.f32 0.0, %v807
      %v809 = vpop.f32.mrf.mxu0
      %v810 = vadd.f32 0.0, %v809
      %811 = vmatprep.mubr.bf16.mxu0 0
      %812 = vmatmul.mubr.bf16.gmra.mxu0 %v601
      %v813 = vpop.f32.mrf.mxu0
      %v814 = vadd.f32 0.0, %v813
      %v815 = vpop.f32.mrf.mxu0
      %v816 = vadd.f32 0.0, %v815
      %v817 = vpop.f32.mrf.mxu0
      %v818 = vadd.f32 0.0, %v817
      %v819 = vpop.f32.mrf.mxu0
      %v820 = vadd.f32 0.0, %v819
      %821 = vmatprep.mubr.bf16.mxu0 0
      %822 = vmatmul.mubr.bf16.gmra.mxu0 %v604
      %v823 = vpop.f32.mrf.mxu0
      %v824 = vadd.f32 0.0, %v823
      %v825 = vpop.f32.mrf.mxu0
      %v826 = vadd.f32 0.0, %v825
      %v827 = vpop.f32.mrf.mxu0
      %v828 = vadd.f32 0.0, %v827
      %v829 = vpop.f32.mrf.mxu0
      %v830 = vadd.f32 0.0, %v829
      %831 = vdwg.mxu0
      %v832 = vmax.f32 %v641, 0.0
      %v833 = vmax.f32 %v643, 0.0
      %v834 = vmax.f32 %v754, 0.0
      %v835 = vmax.f32 %v756, 0.0
      %v836 = vmax.f32 %v645, 0.0
      %v837 = vmax.f32 %v647, 0.0
      %v838 = vmax.f32 %v758, 0.0
      %v839 = vmax.f32 %v760, 0.0
      %v840 = vmax.f32 %v651, 0.0
      %v841 = vmax.f32 %v653, 0.0
      %v842 = vmax.f32 %v764, 0.0
      %v843 = vmax.f32 %v766, 0.0
      %v844 = vmax.f32 %v655, 0.0
      %v845 = vmax.f32 %v657, 0.0
      %v846 = vmax.f32 %v768, 0.0
      %v847 = vmax.f32 %v770, 0.0
      %v848 = vmax.f32 %v661, 0.0
      %v849 = vmax.f32 %v663, 0.0
      %v850 = vmax.f32 %v774, 0.0
      %v851 = vmax.f32 %v776, 0.0
      %v852 = vmax.f32 %v665, 0.0
      %v853 = vmax.f32 %v667, 0.0
      %v854 = vmax.f32 %v778, 0.0
      %v855 = vmax.f32 %v780, 0.0
      %v856 = vmax.f32 %v671, 0.0
      %v857 = vmax.f32 %v673, 0.0
      %v858 = vmax.f32 %v784, 0.0
      %v859 = vmax.f32 %v786, 0.0
      %v860 = vmax.f32 %v675, 0.0
      %v861 = vmax.f32 %v677, 0.0
      %v862 = vmax.f32 %v788, 0.0
      %v863 = vmax.f32 %v790, 0.0
      %v864 = vmax.f32 %v681, 0.0
      %v865 = vmax.f32 %v683, 0.0
      %v866 = vmax.f32 %v794, 0.0
      %v867 = vmax.f32 %v796, 0.0
      %v868 = vmax.f32 %v685, 0.0
      %v869 = vmax.f32 %v687, 0.0
      %v870 = vmax.f32 %v798, 0.0
      %v871 = vmax.f32 %v800, 0.0
      %v872 = vmax.f32 %v691, 0.0
      %v873 = vmax.f32 %v693, 0.0
      %v874 = vmax.f32 %v804, 0.0
      %v875 = vmax.f32 %v806, 0.0
      %v876 = vmax.f32 %v695, 0.0
      %v877 = vmax.f32 %v697, 0.0
      %v878 = vmax.f32 %v808, 0.0
      %v879 = vmax.f32 %v810, 0.0
      %v880 = vmax.f32 %v701, 0.0
      %v881 = vmax.f32 %v703, 0.0
      %v882 = vmax.f32 %v814, 0.0
      %v883 = vmax.f32 %v816, 0.0
      %v884 = vmax.f32 %v705, 0.0
      %v885 = vmax.f32 %v707, 0.0
      %v886 = vmax.f32 %v818, 0.0
      %v887 = vmax.f32 %v820, 0.0
      %v888 = vmax.f32 %v711, 0.0
      %v889 = vmax.f32 %v713, 0.0
      %v890 = vmax.f32 %v824, 0.0
      %v891 = vmax.f32 %v826, 0.0
      %v892 = vmax.f32 %v715, 0.0
      %v893 = vmax.f32 %v717, 0.0
      %v894 = vmax.f32 %v828, 0.0
      %v895 = vmax.f32 %v830, 0.0
      %v896 = vpack.c.bf16 %v836, %v832
      %v897 = vpack.c.bf16 %v837, %v833
      %v898 = vpack.c.bf16 %v838, %v834
      %v899 = vpack.c.bf16 %v839, %v835
      %v900 = vpack.c.bf16 %v844, %v840
      %v901 = vpack.c.bf16 %v845, %v841
      %v902 = vpack.c.bf16 %v846, %v842
      %v903 = vpack.c.bf16 %v847, %v843
      %v904 = vpack.c.bf16 %v852, %v848
      %v905 = vpack.c.bf16 %v853, %v849
      %v906 = vpack.c.bf16 %v854, %v850
      %v907 = vpack.c.bf16 %v855, %v851
      %v908 = vpack.c.bf16 %v860, %v856
      %v909 = vpack.c.bf16 %v861, %v857
      %v910 = vpack.c.bf16 %v862, %v858
      %v911 = vpack.c.bf16 %v863, %v859
      %v912 = vpack.c.bf16 %v868, %v864
      %v913 = vpack.c.bf16 %v869, %v865
      %v914 = vpack.c.bf16 %v870, %v866
      %v915 = vpack.c.bf16 %v871, %v867
      %v916 = vpack.c.bf16 %v876, %v872
      %v917 = vpack.c.bf16 %v877, %v873
      %v918 = vpack.c.bf16 %v878, %v874
      %v919 = vpack.c.bf16 %v879, %v875
      %v920 = vpack.c.bf16 %v884, %v880
      %v921 = vpack.c.bf16 %v885, %v881
      %v922 = vpack.c.bf16 %v886, %v882
      %v923 = vpack.c.bf16 %v887, %v883
      %v924 = vpack.c.bf16 %v892, %v888
      %v925 = vpack.c.bf16 %v893, %v889
      %v926 = vpack.c.bf16 %v894, %v890
      %v927 = vpack.c.bf16 %v895, %v891
      %v928 = vld [vmem:[%s3] sm:$0xf]
      %v929 = vld [vmem:[%s3 + $0x4] sm:$0xf]
      %v930 = vld [vmem:[%s3 + $0x8] sm:$0xf]
      %v931 = vld [vmem:[%s3 + $0xc] sm:$0xf]
      %v932 = vld [vmem:[%s3 + $0x10] sm:$0xf]
      %v933 = vld [vmem:[%s3 + $0x14] sm:$0xf]
      %v934 = vld [vmem:[%s3 + $0x18] sm:$0xf]
      %v935 = vld [vmem:[%s3 + $0x1c] sm:$0xf]
      %v936 = vld [vmem:[%s3 + $0x20] sm:$0xf]
      %v937 = vld [vmem:[%s3 + $0x24] sm:$0xf]
      %v938 = vld [vmem:[%s3 + $0x28] sm:$0xf]
      %v939 = vld [vmem:[%s3 + $0x2c] sm:$0xf]
      %v940 = vld [vmem:[%s3 + $0x30] sm:$0xf]
      %v941 = vld [vmem:[%s3 + $0x34] sm:$0xf]
      %v942 = vld [vmem:[%s3 + $0x38] sm:$0xf]
      %v943 = vld [vmem:[%s3 + $0x3c] sm:$0xf]
      %v944 = vld [vmem:[%s3 + $0x40] sm:$0xf]
      %v945 = vld [vmem:[%s3 + $0x44] sm:$0xf]
      %v946 = vld [vmem:[%s3 + $0x48] sm:$0xf]
      %v947 = vld [vmem:[%s3 + $0x4c] sm:$0xf]
      %v948 = vld [vmem:[%s3 + $0x50] sm:$0xf]
      %v949 = vld [vmem:[%s3 + $0x54] sm:$0xf]
      %v950 = vld [vmem:[%s3 + $0x58] sm:$0xf]
      %v951 = vld [vmem:[%s3 + $0x5c] sm:$0xf]
      %v952 = vld [vmem:[%s3 + $0x60] sm:$0xf]
      %v953 = vld [vmem:[%s3 + $0x64] sm:$0xf]
      %v954 = vld [vmem:[%s3 + $0x68] sm:$0xf]
      %v955 = vld [vmem:[%s3 + $0x6c] sm:$0xf]
      %v956 = vld [vmem:[%s3 + $0x70] sm:$0xf]
      %v957 = vld [vmem:[%s3 + $0x74] sm:$0xf]
      %v958 = vld [vmem:[%s3 + $0x78] sm:$0xf]
      %v959 = vld [vmem:[%s3 + $0x7c] sm:$0xf]
      %v992 = vunpack.c.l.b16 %v928
      %v993 = vunpack.c.l.b16 %v929
      %v994 = vunpack.c.l.b16 %v930
      %v995 = vunpack.c.l.b16 %v931
      %v996 = vunpack.c.l.b16 %v932
      %v997 = vunpack.c.l.b16 %v933
      %v998 = vunpack.c.l.b16 %v934
      %v999 = vunpack.c.l.b16 %v935
      %v1000 = vunpack.c.l.b16 %v936
      %v1001 = vunpack.c.l.b16 %v937
      %v1002 = vunpack.c.l.b16 %v938
      %v1003 = vunpack.c.l.b16 %v939
      %v1004 = vunpack.c.l.b16 %v940
      %v1005 = vunpack.c.l.b16 %v941
      %v1006 = vunpack.c.l.b16 %v942
      %v1007 = vunpack.c.l.b16 %v943
      %v1008 = vunpack.c.l.b16 %v944
      %v1009 = vunpack.c.l.b16 %v945
      %v1010 = vunpack.c.l.b16 %v946
      %v1011 = vunpack.c.l.b16 %v947
      %v1012 = vunpack.c.l.b16 %v948
      %v1013 = vunpack.c.l.b16 %v949
      %v1014 = vunpack.c.l.b16 %v950
      %v1015 = vunpack.c.l.b16 %v951
      %v1016 = vunpack.c.l.b16 %v952
      %v1017 = vunpack.c.l.b16 %v953
      %v1018 = vunpack.c.l.b16 %v954
      %v1019 = vunpack.c.l.b16 %v955
      %v1020 = vunpack.c.l.b16 %v956
      %v1021 = vunpack.c.l.b16 %v957
      %v1022 = vunpack.c.l.b16 %v958
      %v1023 = vunpack.c.l.b16 %v959
      %v1024 = vpack.c.b16 %v993, %v992
      %v1025 = vpack.c.b16 %v995, %v994
      %v1026 = vpack.c.b16 %v997, %v996
      %v1027 = vpack.c.b16 %v999, %v998
      %v1028 = vpack.c.b16 %v1001, %v1000
      %v1029 = vpack.c.b16 %v1003, %v1002
      %v1030 = vpack.c.b16 %v1005, %v1004
      %v1031 = vpack.c.b16 %v1007, %v1006
      %v1032 = vpack.c.b16 %v1009, %v1008
      %v1033 = vpack.c.b16 %v1011, %v1010
      %v1034 = vpack.c.b16 %v1013, %v1012
      %v1035 = vpack.c.b16 %v1015, %v1014
      %v1036 = vpack.c.b16 %v1017, %v1016
      %v1037 = vpack.c.b16 %v1019, %v1018
      %v1038 = vpack.c.b16 %v1021, %v1020
      %v1039 = vpack.c.b16 %v1023, %v1022
      %1056 = vmatprep.subr.bf16.mxu0 %v925
      %1057 = vmatpush1.bf16.msra.mxu0 %v924
      %1058 = vmatprep.subr.bf16.mxu0 %v921
      %1059 = vmatpush1.bf16.msra.mxu0 %v920
      %1060 = vmatprep.subr.bf16.mxu0 %v917
      %1061 = vmatpush1.bf16.msra.mxu0 %v916
      %1062 = vmatprep.subr.bf16.mxu0 %v913
      %1063 = vmatpush1.bf16.msra.mxu0 %v912
      %1064 = vmatprep.subr.bf16.mxu0 %v909
      %1065 = vmatpush1.bf16.msra.mxu0 %v908
      %1066 = vmatprep.subr.bf16.mxu0 %v905
      %1067 = vmatpush1.bf16.msra.mxu0 %v904
      %1068 = vmatprep.subr.bf16.mxu0 %v901
      %1069 = vmatpush1.bf16.msra.mxu0 %v900
      %1070 = vmatprep.subr.bf16.mxu0 %v897
      %1071 = vmatpush1.bf16.msra.mxu0 %v896
      %1072 = vmatprep.subr.bf16.mxu0 0
      %1073 = vmatpush2.bf16.msra.mxu0 0
      %1074 = vmatprep.subr.bf16.mxu0 0
      %1075 = vmatpush2.bf16.msra.mxu0 0
      %1076 = vmatprep.subr.bf16.mxu0 0
      %1077 = vmatpush2.bf16.msra.mxu0 0
      %1078 = vmatprep.subr.bf16.mxu0 0
      %1079 = vmatpush2.bf16.msra.mxu0 0
      %1080 = vmatprep.subr.bf16.mxu0 0
      %1081 = vmatpush2.bf16.msra.mxu0 0
      %1082 = vmatprep.subr.bf16.mxu0 0
      %1083 = vmatpush2.bf16.msra.mxu0 0
      %1084 = vmatprep.subr.bf16.mxu0 0
      %1085 = vmatpush2.bf16.msra.mxu0 0
      %1086 = vmatprep.subr.bf16.mxu0 0
      %1087 = vmatpush2.bf16.msra.mxu0 0
      %1088 = vmatprep.mubr.bf16.mxu0 0
      %1089 = vmatmul.mubr.bf16.gmra.mxu0 %v1024
      %v1090 = vpop.f32.mrf.mxu0
      %v1091 = vadd.f32 0.0, %v1090
      %v1092 = vpop.f32.mrf.mxu0
      %v1093 = vadd.f32 0.0, %v1092
      %v1094 = vpop.f32.mrf.mxu0
      %v1095 = vadd.f32 0.0, %v1094
      %v1096 = vpop.f32.mrf.mxu0
      %v1097 = vadd.f32 0.0, %v1096
      %1098 = vmatprep.mubr.bf16.mxu0 0
      %1099 = vmatmul.mubr.bf16.gmra.mxu0 %v1025
      %v1100 = vpop.f32.mrf.mxu0
      %v1101 = vadd.f32 0.0, %v1100
      %v1102 = vpop.f32.mrf.mxu0
      %v1103 = vadd.f32 0.0, %v1102
      %v1104 = vpop.f32.mrf.mxu0
      %v1105 = vadd.f32 0.0, %v1104
      %v1106 = vpop.f32.mrf.mxu0
      %v1107 = vadd.f32 0.0, %v1106
      %1108 = vmatprep.mubr.bf16.mxu0 0
      %1109 = vmatmul.mubr.bf16.gmra.mxu0 %v1026
      %v1110 = vpop.f32.mrf.mxu0
      %v1111 = vadd.f32 0.0, %v1110
      %v1112 = vpop.f32.mrf.mxu0
      %v1113 = vadd.f32 0.0, %v1112
      %v1114 = vpop.f32.mrf.mxu0
      %v1115 = vadd.f32 0.0, %v1114
      %v1116 = vpop.f32.mrf.mxu0
      %v1117 = vadd.f32 0.0, %v1116
      %1118 = vmatprep.mubr.bf16.mxu0 0
      %1119 = vmatmul.mubr.bf16.gmra.mxu0 %v1027
      %v1120 = vpop.f32.mrf.mxu0
      %v1121 = vadd.f32 0.0, %v1120
      %v1122 = vpop.f32.mrf.mxu0
      %v1123 = vadd.f32 0.0, %v1122
      %v1124 = vpop.f32.mrf.mxu0
      %v1125 = vadd.f32 0.0, %v1124
      %v1126 = vpop.f32.mrf.mxu0
      %v1127 = vadd.f32 0.0, %v1126
      %1128 = vmatprep.mubr.bf16.mxu0 0
      %1129 = vmatmul.mubr.bf16.gmra.mxu0 %v1028
      %v1130 = vpop.f32.mrf.mxu0
      %v1131 = vadd.f32 0.0, %v1130
      %v1132 = vpop.f32.mrf.mxu0
      %v1133 = vadd.f32 0.0, %v1132
      %v1134 = vpop.f32.mrf.mxu0
      %v1135 = vadd.f32 0.0, %v1134
      %v1136 = vpop.f32.mrf.mxu0
      %v1137 = vadd.f32 0.0, %v1136
      %1138 = vmatprep.mubr.bf16.mxu0 0
      %1139 = vmatmul.mubr.bf16.gmra.mxu0 %v1029
      %v1140 = vpop.f32.mrf.mxu0
      %v1141 = vadd.f32 0.0, %v1140
      %v1142 = vpop.f32.mrf.mxu0
      %v1143 = vadd.f32 0.0, %v1142
      %v1144 = vpop.f32.mrf.mxu0
      %v1145 = vadd.f32 0.0, %v1144
      %v1146 = vpop.f32.mrf.mxu0
      %v1147 = vadd.f32 0.0, %v1146
      %1148 = vmatprep.mubr.bf16.mxu0 0
      %1149 = vmatmul.mubr.bf16.gmra.mxu0 %v1030
      %v1150 = vpop.f32.mrf.mxu0
      %v1151 = vadd.f32 0.0, %v1150
      %v1152 = vpop.f32.mrf.mxu0
      %v1153 = vadd.f32 0.0, %v1152
      %v1154 = vpop.f32.mrf.mxu0
      %v1155 = vadd.f32 0.0, %v1154
      %v1156 = vpop.f32.mrf.mxu0
      %v1157 = vadd.f32 0.0, %v1156
      %1158 = vmatprep.mubr.bf16.mxu0 0
      %1159 = vmatmul.mubr.bf16.gmra.mxu0 %v1031
      %v1160 = vpop.f32.mrf.mxu0
      %v1161 = vadd.f32 0.0, %v1160
      %v1162 = vpop.f32.mrf.mxu0
      %v1163 = vadd.f32 0.0, %v1162
      %v1164 = vpop.f32.mrf.mxu0
      %v1165 = vadd.f32 0.0, %v1164
      %v1166 = vpop.f32.mrf.mxu0
      %v1167 = vadd.f32 0.0, %v1166
      %1168 = vmatprep.mubr.bf16.mxu0 0
      %1169 = vmatmul.mubr.bf16.gmra.mxu0 %v1032
      %v1170 = vpop.f32.mrf.mxu0
      %v1171 = vadd.f32 0.0, %v1170
      %v1172 = vpop.f32.mrf.mxu0
      %v1173 = vadd.f32 0.0, %v1172
      %v1174 = vpop.f32.mrf.mxu0
      %v1175 = vadd.f32 0.0, %v1174
      %v1176 = vpop.f32.mrf.mxu0
      %v1177 = vadd.f32 0.0, %v1176
      %1178 = vmatprep.mubr.bf16.mxu0 0
      %1179 = vmatmul.mubr.bf16.gmra.mxu0 %v1033
      %v1180 = vpop.f32.mrf.mxu0
      %v1181 = vadd.f32 0.0, %v1180
      %v1182 = vpop.f32.mrf.mxu0
      %v1183 = vadd.f32 0.0, %v1182
      %v1184 = vpop.f32.mrf.mxu0
      %v1185 = vadd.f32 0.0, %v1184
      %v1186 = vpop.f32.mrf.mxu0
      %v1187 = vadd.f32 0.0, %v1186
      %1188 = vmatprep.mubr.bf16.mxu0 0
      %1189 = vmatmul.mubr.bf16.gmra.mxu0 %v1034
      %v1190 = vpop.f32.mrf.mxu0
      %v1191 = vadd.f32 0.0, %v1190
      %v1192 = vpop.f32.mrf.mxu0
      %v1193 = vadd.f32 0.0, %v1192
      %v1194 = vpop.f32.mrf.mxu0
      %v1195 = vadd.f32 0.0, %v1194
      %v1196 = vpop.f32.mrf.mxu0
      %v1197 = vadd.f32 0.0, %v1196
      %1198 = vmatprep.mubr.bf16.mxu0 0
      %1199 = vmatmul.mubr.bf16.gmra.mxu0 %v1035
      %v1200 = vpop.f32.mrf.mxu0
      %v1201 = vadd.f32 0.0, %v1200
      %v1202 = vpop.f32.mrf.mxu0
      %v1203 = vadd.f32 0.0, %v1202
      %v1204 = vpop.f32.mrf.mxu0
      %v1205 = vadd.f32 0.0, %v1204
      %v1206 = vpop.f32.mrf.mxu0
      %v1207 = vadd.f32 0.0, %v1206
      %1208 = vmatprep.mubr.bf16.mxu0 0
      %1209 = vmatmul.mubr.bf16.gmra.mxu0 %v1036
      %v1210 = vpop.f32.mrf.mxu0
      %v1211 = vadd.f32 0.0, %v1210
      %v1212 = vpop.f32.mrf.mxu0
      %v1213 = vadd.f32 0.0, %v1212
      %v1214 = vpop.f32.mrf.mxu0
      %v1215 = vadd.f32 0.0, %v1214
      %v1216 = vpop.f32.mrf.mxu0
      %v1217 = vadd.f32 0.0, %v1216
      %1218 = vmatprep.mubr.bf16.mxu0 0
      %1219 = vmatmul.mubr.bf16.gmra.mxu0 %v1037
      %v1220 = vpop.f32.mrf.mxu0
      %v1221 = vadd.f32 0.0, %v1220
      %v1222 = vpop.f32.mrf.mxu0
      %v1223 = vadd.f32 0.0, %v1222
      %v1224 = vpop.f32.mrf.mxu0
      %v1225 = vadd.f32 0.0, %v1224
      %v1226 = vpop.f32.mrf.mxu0
      %v1227 = vadd.f32 0.0, %v1226
      %1228 = vmatprep.mubr.bf16.mxu0 0
      %1229 = vmatmul.mubr.bf16.gmra.mxu0 %v1038
      %v1230 = vpop.f32.mrf.mxu0
      %v1231 = vadd.f32 0.0, %v1230
      %v1232 = vpop.f32.mrf.mxu0
      %v1233 = vadd.f32 0.0, %v1232
      %v1234 = vpop.f32.mrf.mxu0
      %v1235 = vadd.f32 0.0, %v1234
      %v1236 = vpop.f32.mrf.mxu0
      %v1237 = vadd.f32 0.0, %v1236
      %1238 = vmatprep.mubr.bf16.mxu0 0
      %1239 = vmatmul.mubr.bf16.gmra.mxu0 %v1039
      %v1240 = vpop.f32.mrf.mxu0
      %v1241 = vadd.f32 0.0, %v1240
      %v1242 = vpop.f32.mrf.mxu0
      %v1243 = vadd.f32 0.0, %v1242
      %v1244 = vpop.f32.mrf.mxu0
      %v1245 = vadd.f32 0.0, %v1244
      %v1246 = vpop.f32.mrf.mxu0
      %v1247 = vadd.f32 0.0, %v1246
      %1248 = vdwg.mxu0
      %1249 = vmatprep.subr.bf16.mxu0 %v927
      %1250 = vmatpush1.bf16.msra.mxu0 %v926
      %1251 = vmatprep.subr.bf16.mxu0 %v923
      %1252 = vmatpush1.bf16.msra.mxu0 %v922
      %1253 = vmatprep.subr.bf16.mxu0 %v919
      %1254 = vmatpush1.bf16.msra.mxu0 %v918
      %1255 = vmatprep.subr.bf16.mxu0 %v915
      %1256 = vmatpush1.bf16.msra.mxu0 %v914
      %1257 = vmatprep.subr.bf16.mxu0 %v911
      %1258 = vmatpush1.bf16.msra.mxu0 %v910
      %1259 = vmatprep.subr.bf16.mxu0 %v907
      %1260 = vmatpush1.bf16.msra.mxu0 %v906
      %1261 = vmatprep.subr.bf16.mxu0 %v903
      %1262 = vmatpush1.bf16.msra.mxu0 %v902
      %1263 = vmatprep.subr.bf16.mxu0 %v899
      %1264 = vmatpush1.bf16.msra.mxu0 %v898
      %1265 = vmatprep.subr.bf16.mxu0 0
      %1266 = vmatpush2.bf16.msra.mxu0 0
      %1267 = vmatprep.subr.bf16.mxu0 0
      %1268 = vmatpush2.bf16.msra.mxu0 0
      %1269 = vmatprep.subr.bf16.mxu0 0
      %1270 = vmatpush2.bf16.msra.mxu0 0
      %1271 = vmatprep.subr.bf16.mxu0 0
      %1272 = vmatpush2.bf16.msra.mxu0 0
      %1273 = vmatprep.subr.bf16.mxu0 0
      %1274 = vmatpush2.bf16.msra.mxu0 0
      %1275 = vmatprep.subr.bf16.mxu0 0
      %1276 = vmatpush2.bf16.msra.mxu0 0
      %1277 = vmatprep.subr.bf16.mxu0 0
      %1278 = vmatpush2.bf16.msra.mxu0 0
      %1279 = vmatprep.subr.bf16.mxu0 0
      %1280 = vmatpush2.bf16.msra.mxu0 0
      %1281 = vmatprep.mubr.bf16.mxu0 0
      %1282 = vmatmul.mubr.bf16.gmra.mxu0 %v1024
      %v1283 = vpop.f32.mrf.mxu0
      %v1284 = vadd.f32 0.0, %v1283
      %v1285 = vpop.f32.mrf.mxu0
      %v1286 = vadd.f32 0.0, %v1285
      %v1287 = vpop.f32.mrf.mxu0
      %v1288 = vadd.f32 0.0, %v1287
      %v1289 = vpop.f32.mrf.mxu0
      %v1290 = vadd.f32 0.0, %v1289
      %1291 = vmatprep.mubr.bf16.mxu0 0
      %1292 = vmatmul.mubr.bf16.gmra.mxu0 %v1025
      %v1293 = vpop.f32.mrf.mxu0
      %v1294 = vadd.f32 0.0, %v1293
      %v1295 = vpop.f32.mrf.mxu0
      %v1296 = vadd.f32 0.0, %v1295
      %v1297 = vpop.f32.mrf.mxu0
      %v1298 = vadd.f32 0.0, %v1297
      %v1299 = vpop.f32.mrf.mxu0
      %v1300 = vadd.f32 0.0, %v1299
      %1301 = vmatprep.mubr.bf16.mxu0 0
      %1302 = vmatmul.mubr.bf16.gmra.mxu0 %v1026
      %v1303 = vpop.f32.mrf.mxu0
      %v1304 = vadd.f32 0.0, %v1303
      %v1305 = vpop.f32.mrf.mxu0
      %v1306 = vadd.f32 0.0, %v1305
      %v1307 = vpop.f32.mrf.mxu0
      %v1308 = vadd.f32 0.0, %v1307
      %v1309 = vpop.f32.mrf.mxu0
      %v1310 = vadd.f32 0.0, %v1309
      %1311 = vmatprep.mubr.bf16.mxu0 0
      %1312 = vmatmul.mubr.bf16.gmra.mxu0 %v1027
      %v1313 = vpop.f32.mrf.mxu0
      %v1314 = vadd.f32 0.0, %v1313
      %v1315 = vpop.f32.mrf.mxu0
      %v1316 = vadd.f32 0.0, %v1315
      %v1317 = vpop.f32.mrf.mxu0
      %v1318 = vadd.f32 0.0, %v1317
      %v1319 = vpop.f32.mrf.mxu0
      %v1320 = vadd.f32 0.0, %v1319
      %1321 = vmatprep.mubr.bf16.mxu0 0
      %1322 = vmatmul.mubr.bf16.gmra.mxu0 %v1028
      %v1323 = vpop.f32.mrf.mxu0
      %v1324 = vadd.f32 0.0, %v1323
      %v1325 = vpop.f32.mrf.mxu0
      %v1326 = vadd.f32 0.0, %v1325
      %v1327 = vpop.f32.mrf.mxu0
      %v1328 = vadd.f32 0.0, %v1327
      %v1329 = vpop.f32.mrf.mxu0
      %v1330 = vadd.f32 0.0, %v1329
      %1331 = vmatprep.mubr.bf16.mxu0 0
      %1332 = vmatmul.mubr.bf16.gmra.mxu0 %v1029
      %v1333 = vpop.f32.mrf.mxu0
      %v1334 = vadd.f32 0.0, %v1333
      %v1335 = vpop.f32.mrf.mxu0
      %v1336 = vadd.f32 0.0, %v1335
      %v1337 = vpop.f32.mrf.mxu0
      %v1338 = vadd.f32 0.0, %v1337
      %v1339 = vpop.f32.mrf.mxu0
      %v1340 = vadd.f32 0.0, %v1339
      %1341 = vmatprep.mubr.bf16.mxu0 0
      %1342 = vmatmul.mubr.bf16.gmra.mxu0 %v1030
      %v1343 = vpop.f32.mrf.mxu0
      %v1344 = vadd.f32 0.0, %v1343
      %v1345 = vpop.f32.mrf.mxu0
      %v1346 = vadd.f32 0.0, %v1345
      %v1347 = vpop.f32.mrf.mxu0
      %v1348 = vadd.f32 0.0, %v1347
      %v1349 = vpop.f32.mrf.mxu0
      %v1350 = vadd.f32 0.0, %v1349
      %1351 = vmatprep.mubr.bf16.mxu0 0
      %1352 = vmatmul.mubr.bf16.gmra.mxu0 %v1031
      %v1353 = vpop.f32.mrf.mxu0
      %v1354 = vadd.f32 0.0, %v1353
      %v1355 = vpop.f32.mrf.mxu0
      %v1356 = vadd.f32 0.0, %v1355
      %v1357 = vpop.f32.mrf.mxu0
      %v1358 = vadd.f32 0.0, %v1357
      %v1359 = vpop.f32.mrf.mxu0
      %v1360 = vadd.f32 0.0, %v1359
      %1361 = vmatprep.mubr.bf16.mxu0 0
      %1362 = vmatmul.mubr.bf16.gmra.mxu0 %v1032
      %v1363 = vpop.f32.mrf.mxu0
      %v1364 = vadd.f32 0.0, %v1363
      %v1365 = vpop.f32.mrf.mxu0
      %v1366 = vadd.f32 0.0, %v1365
      %v1367 = vpop.f32.mrf.mxu0
      %v1368 = vadd.f32 0.0, %v1367
      %v1369 = vpop.f32.mrf.mxu0
      %v1370 = vadd.f32 0.0, %v1369
      %1371 = vmatprep.mubr.bf16.mxu0 0
      %1372 = vmatmul.mubr.bf16.gmra.mxu0 %v1033
      %v1373 = vpop.f32.mrf.mxu0
      %v1374 = vadd.f32 0.0, %v1373
      %v1375 = vpop.f32.mrf.mxu0
      %v1376 = vadd.f32 0.0, %v1375
      %v1377 = vpop.f32.mrf.mxu0
      %v1378 = vadd.f32 0.0, %v1377
      %v1379 = vpop.f32.mrf.mxu0
      %v1380 = vadd.f32 0.0, %v1379
      %1381 = vmatprep.mubr.bf16.mxu0 0
      %1382 = vmatmul.mubr.bf16.gmra.mxu0 %v1034
      %v1383 = vpop.f32.mrf.mxu0
      %v1384 = vadd.f32 0.0, %v1383
      %v1385 = vpop.f32.mrf.mxu0
      %v1386 = vadd.f32 0.0, %v1385
      %v1387 = vpop.f32.mrf.mxu0
      %v1388 = vadd.f32 0.0, %v1387
      %v1389 = vpop.f32.mrf.mxu0
      %v1390 = vadd.f32 0.0, %v1389
      %1391 = vmatprep.mubr.bf16.mxu0 0
      %1392 = vmatmul.mubr.bf16.gmra.mxu0 %v1035
      %v1393 = vpop.f32.mrf.mxu0
      %v1394 = vadd.f32 0.0, %v1393
      %v1395 = vpop.f32.mrf.mxu0
      %v1396 = vadd.f32 0.0, %v1395
      %v1397 = vpop.f32.mrf.mxu0
      %v1398 = vadd.f32 0.0, %v1397
      %v1399 = vpop.f32.mrf.mxu0
      %v1400 = vadd.f32 0.0, %v1399
      %1401 = vmatprep.mubr.bf16.mxu0 0
      %1402 = vmatmul.mubr.bf16.gmra.mxu0 %v1036
      %v1403 = vpop.f32.mrf.mxu0
      %v1404 = vadd.f32 0.0, %v1403
      %v1405 = vpop.f32.mrf.mxu0
      %v1406 = vadd.f32 0.0, %v1405
      %v1407 = vpop.f32.mrf.mxu0
      %v1408 = vadd.f32 0.0, %v1407
      %v1409 = vpop.f32.mrf.mxu0
      %v1410 = vadd.f32 0.0, %v1409
      %1411 = vmatprep.mubr.bf16.mxu0 0
      %1412 = vmatmul.mubr.bf16.gmra.mxu0 %v1037
      %v1413 = vpop.f32.mrf.mxu0
      %v1414 = vadd.f32 0.0, %v1413
      %v1415 = vpop.f32.mrf.mxu0
      %v1416 = vadd.f32 0.0, %v1415
      %v1417 = vpop.f32.mrf.mxu0
      %v1418 = vadd.f32 0.0, %v1417
      %v1419 = vpop.f32.mrf.mxu0
      %v1420 = vadd.f32 0.0, %v1419
      %1421 = vmatprep.mubr.bf16.mxu0 0
      %1422 = vmatmul.mubr.bf16.gmra.mxu0 %v1038
      %v1423 = vpop.f32.mrf.mxu0
      %v1424 = vadd.f32 0.0, %v1423
      %v1425 = vpop.f32.mrf.mxu0
      %v1426 = vadd.f32 0.0, %v1425
      %v1427 = vpop.f32.mrf.mxu0
      %v1428 = vadd.f32 0.0, %v1427
      %v1429 = vpop.f32.mrf.mxu0
      %v1430 = vadd.f32 0.0, %v1429
      %1431 = vmatprep.mubr.bf16.mxu0 0
      %1432 = vmatmul.mubr.bf16.gmra.mxu0 %v1039
      %v1433 = vpop.f32.mrf.mxu0
      %v1434 = vadd.f32 0.0, %v1433
      %v1435 = vpop.f32.mrf.mxu0
      %v1436 = vadd.f32 0.0, %v1435
      %v1437 = vpop.f32.mrf.mxu0
      %v1438 = vadd.f32 0.0, %v1437
      %v1439 = vpop.f32.mrf.mxu0
      %v1440 = vadd.f32 0.0, %v1439
      %1441 = vdwg.mxu0
      %v1442 = vmax.f32 %v1091, 0.0
      %v1443 = vmax.f32 %v1093, 0.0
      %v1444 = vmax.f32 %v1284, 0.0
      %v1445 = vmax.f32 %v1286, 0.0
      %v1446 = vmax.f32 %v1095, 0.0
      %v1447 = vmax.f32 %v1097, 0.0
      %v1448 = vmax.f32 %v1288, 0.0
      %v1449 = vmax.f32 %v1290, 0.0
      %v1450 = vmax.f32 %v1101, 0.0
      %v1451 = vmax.f32 %v1103, 0.0
      %v1452 = vmax.f32 %v1294, 0.0
      %v1453 = vmax.f32 %v1296, 0.0
      %v1454 = vmax.f32 %v1105, 0.0
      %v1455 = vmax.f32 %v1107, 0.0
      %v1456 = vmax.f32 %v1298, 0.0
      %v1457 = vmax.f32 %v1300, 0.0
      %v1458 = vmax.f32 %v1111, 0.0
      %v1459 = vmax.f32 %v1113, 0.0
      %v1460 = vmax.f32 %v1304, 0.0
      %v1461 = vmax.f32 %v1306, 0.0
      %v1462 = vmax.f32 %v1115, 0.0
      %v1463 = vmax.f32 %v1117, 0.0
      %v1464 = vmax.f32 %v1308, 0.0
      %v1465 = vmax.f32 %v1310, 0.0
      %v1466 = vmax.f32 %v1121, 0.0
      %v1467 = vmax.f32 %v1123, 0.0
      %v1468 = vmax.f32 %v1314, 0.0
      %v1469 = vmax.f32 %v1316, 0.0
      %v1470 = vmax.f32 %v1125, 0.0
      %v1471 = vmax.f32 %v1127, 0.0
      %v1472 = vmax.f32 %v1318, 0.0
      %v1473 = vmax.f32 %v1320, 0.0
      %v1474 = vmax.f32 %v1131, 0.0
      %v1475 = vmax.f32 %v1133, 0.0
      %v1476 = vmax.f32 %v1324, 0.0
      %v1477 = vmax.f32 %v1326, 0.0
      %v1478 = vmax.f32 %v1135, 0.0
      %v1479 = vmax.f32 %v1137, 0.0
      %v1480 = vmax.f32 %v1328, 0.0
      %v1481 = vmax.f32 %v1330, 0.0
      %v1482 = vmax.f32 %v1141, 0.0
      %v1483 = vmax.f32 %v1143, 0.0
      %v1484 = vmax.f32 %v1334, 0.0
      %v1485 = vmax.f32 %v1336, 0.0
      %v1486 = vmax.f32 %v1145, 0.0
      %v1487 = vmax.f32 %v1147, 0.0
      %v1488 = vmax.f32 %v1338, 0.0
      %v1489 = vmax.f32 %v1340, 0.0
      %v1490 = vmax.f32 %v1151, 0.0
      %v1491 = vmax.f32 %v1153, 0.0
      %v1492 = vmax.f32 %v1344, 0.0
      %v1493 = vmax.f32 %v1346, 0.0
      %v1494 = vmax.f32 %v1155, 0.0
      %v1495 = vmax.f32 %v1157, 0.0
      %v1496 = vmax.f32 %v1348, 0.0
      %v1497 = vmax.f32 %v1350, 0.0
      %v1498 = vmax.f32 %v1161, 0.0
      %v1499 = vmax.f32 %v1163, 0.0
      %v1500 = vmax.f32 %v1354, 0.0
      %v1501 = vmax.f32 %v1356, 0.0
      %v1502 = vmax.f32 %v1165, 0.0
      %v1503 = vmax.f32 %v1167, 0.0
      %v1504 = vmax.f32 %v1358, 0.0
      %v1505 = vmax.f32 %v1360, 0.0
      %v1506 = vmax.f32 %v1171, 0.0
      %v1507 = vmax.f32 %v1173, 0.0
      %v1508 = vmax.f32 %v1364, 0.0
      %v1509 = vmax.f32 %v1366, 0.0
      %v1510 = vmax.f32 %v1175, 0.0
      %v1511 = vmax.f32 %v1177, 0.0
      %v1512 = vmax.f32 %v1368, 0.0
      %v1513 = vmax.f32 %v1370, 0.0
      %v1514 = vmax.f32 %v1181, 0.0
      %v1515 = vmax.f32 %v1183, 0.0
      %v1516 = vmax.f32 %v1374, 0.0
      %v1517 = vmax.f32 %v1376, 0.0
      %v1518 = vmax.f32 %v1185, 0.0
      %v1519 = vmax.f32 %v1187, 0.0
      %v1520 = vmax.f32 %v1378, 0.0
      %v1521 = vmax.f32 %v1380, 0.0
      %v1522 = vmax.f32 %v1191, 0.0
      %v1523 = vmax.f32 %v1193, 0.0
      %v1524 = vmax.f32 %v1384, 0.0
      %v1525 = vmax.f32 %v1386, 0.0
      %v1526 = vmax.f32 %v1195, 0.0
      %v1527 = vmax.f32 %v1197, 0.0
      %v1528 = vmax.f32 %v1388, 0.0
      %v1529 = vmax.f32 %v1390, 0.0
      %v1530 = vmax.f32 %v1201, 0.0
      %v1531 = vmax.f32 %v1203, 0.0
      %v1532 = vmax.f32 %v1394, 0.0
      %v1533 = vmax.f32 %v1396, 0.0
      %v1534 = vmax.f32 %v1205, 0.0
      %v1535 = vmax.f32 %v1207, 0.0
      %v1536 = vmax.f32 %v1398, 0.0
      %v1537 = vmax.f32 %v1400, 0.0
      %v1538 = vmax.f32 %v1211, 0.0
      %v1539 = vmax.f32 %v1213, 0.0
      %v1540 = vmax.f32 %v1404, 0.0
      %v1541 = vmax.f32 %v1406, 0.0
      %v1542 = vmax.f32 %v1215, 0.0
      %v1543 = vmax.f32 %v1217, 0.0
      %v1544 = vmax.f32 %v1408, 0.0
      %v1545 = vmax.f32 %v1410, 0.0
      %v1546 = vmax.f32 %v1221, 0.0
      %v1547 = vmax.f32 %v1223, 0.0
      %v1548 = vmax.f32 %v1414, 0.0
      %v1549 = vmax.f32 %v1416, 0.0
      %v1550 = vmax.f32 %v1225, 0.0
      %v1551 = vmax.f32 %v1227, 0.0
      %v1552 = vmax.f32 %v1418, 0.0
      %v1553 = vmax.f32 %v1420, 0.0
      %v1554 = vmax.f32 %v1231, 0.0
      %v1555 = vmax.f32 %v1233, 0.0
      %v1556 = vmax.f32 %v1424, 0.0
      %v1557 = vmax.f32 %v1426, 0.0
      %v1558 = vmax.f32 %v1235, 0.0
      %v1559 = vmax.f32 %v1237, 0.0
      %v1560 = vmax.f32 %v1428, 0.0
      %v1561 = vmax.f32 %v1430, 0.0
      %v1562 = vmax.f32 %v1241, 0.0
      %v1563 = vmax.f32 %v1243, 0.0
      %v1564 = vmax.f32 %v1434, 0.0
      %v1565 = vmax.f32 %v1436, 0.0
      %v1566 = vmax.f32 %v1245, 0.0
      %v1567 = vmax.f32 %v1247, 0.0
      %v1568 = vmax.f32 %v1438, 0.0
      %v1569 = vmax.f32 %v1440, 0.0
      %v1570 = vpack.c.bf16 %v1446, %v1442
      %v1571 = vpack.c.bf16 %v1447, %v1443
      %v1572 = vpack.c.bf16 %v1448, %v1444
      %v1573 = vpack.c.bf16 %v1449, %v1445
      %v1574 = vpack.c.bf16 %v1454, %v1450
      %v1575 = vpack.c.bf16 %v1455, %v1451
      %v1576 = vpack.c.bf16 %v1456, %v1452
      %v1577 = vpack.c.bf16 %v1457, %v1453
      %v1578 = vpack.c.bf16 %v1462, %v1458
      %v1579 = vpack.c.bf16 %v1463, %v1459
      %v1580 = vpack.c.bf16 %v1464, %v1460
      %v1581 = vpack.c.bf16 %v1465, %v1461
      %v1582 = vpack.c.bf16 %v1470, %v1466
      %v1583 = vpack.c.bf16 %v1471, %v1467
      %v1584 = vpack.c.bf16 %v1472, %v1468
      %v1585 = vpack.c.bf16 %v1473, %v1469
      %v1586 = vpack.c.bf16 %v1478, %v1474
      %v1587 = vpack.c.bf16 %v1479, %v1475
      %v1588 = vpack.c.bf16 %v1480, %v1476
      %v1589 = vpack.c.bf16 %v1481, %v1477
      %v1590 = vpack.c.bf16 %v1486, %v1482
      %v1591 = vpack.c.bf16 %v1487, %v1483
      %v1592 = vpack.c.bf16 %v1488, %v1484
      %v1593 = vpack.c.bf16 %v1489, %v1485
      %v1594 = vpack.c.bf16 %v1494, %v1490
      %v1595 = vpack.c.bf16 %v1495, %v1491
      %v1596 = vpack.c.bf16 %v1496, %v1492
      %v1597 = vpack.c.bf16 %v1497, %v1493
      %v1598 = vpack.c.bf16 %v1502, %v1498
      %v1599 = vpack.c.bf16 %v1503, %v1499
      %v1600 = vpack.c.bf16 %v1504, %v1500
      %v1601 = vpack.c.bf16 %v1505, %v1501
      %v1602 = vpack.c.bf16 %v1510, %v1506
      %v1603 = vpack.c.bf16 %v1511, %v1507
      %v1604 = vpack.c.bf16 %v1512, %v1508
      %v1605 = vpack.c.bf16 %v1513, %v1509
      %v1606 = vpack.c.bf16 %v1518, %v1514
      %v1607 = vpack.c.bf16 %v1519, %v1515
      %v1608 = vpack.c.bf16 %v1520, %v1516
      %v1609 = vpack.c.bf16 %v1521, %v1517
      %v1610 = vpack.c.bf16 %v1526, %v1522
      %v1611 = vpack.c.bf16 %v1527, %v1523
      %v1612 = vpack.c.bf16 %v1528, %v1524
      %v1613 = vpack.c.bf16 %v1529, %v1525
      %v1614 = vpack.c.bf16 %v1534, %v1530
      %v1615 = vpack.c.bf16 %v1535, %v1531
      %v1616 = vpack.c.bf16 %v1536, %v1532
      %v1617 = vpack.c.bf16 %v1537, %v1533
      %v1618 = vpack.c.bf16 %v1542, %v1538
      %v1619 = vpack.c.bf16 %v1543, %v1539
      %v1620 = vpack.c.bf16 %v1544, %v1540
      %v1621 = vpack.c.bf16 %v1545, %v1541
      %v1622 = vpack.c.bf16 %v1550, %v1546
      %v1623 = vpack.c.bf16 %v1551, %v1547
      %v1624 = vpack.c.bf16 %v1552, %v1548
      %v1625 = vpack.c.bf16 %v1553, %v1549
      %v1626 = vpack.c.bf16 %v1558, %v1554
      %v1627 = vpack.c.bf16 %v1559, %v1555
      %v1628 = vpack.c.bf16 %v1560, %v1556
      %v1629 = vpack.c.bf16 %v1561, %v1557
      %v1630 = vpack.c.bf16 %v1566, %v1562
      %v1631 = vpack.c.bf16 %v1567, %v1563
      %v1632 = vpack.c.bf16 %v1568, %v1564
      %v1633 = vpack.c.bf16 %v1569, %v1565
      %v1634 = vld [vmem:[%s4] sm:$0xff]
      %v1635 = vld [vmem:[%s4 + $0x8] sm:$0xff]
      %v1636 = vld [vmem:[%s4 + $0x10] sm:$0xff]
      %v1637 = vld [vmem:[%s4 + $0x18] sm:$0xff]
      %v1638 = vld [vmem:[%s4 + $0x20] sm:$0xff]
      %v1639 = vld [vmem:[%s4 + $0x28] sm:$0xff]
      %v1640 = vld [vmem:[%s4 + $0x30] sm:$0xff]
      %v1641 = vld [vmem:[%s4 + $0x38] sm:$0xff]
      %v1642 = vld [vmem:[%s4 + $0x40] sm:$0xff]
      %v1643 = vld [vmem:[%s4 + $0x48] sm:$0xff]
      %v1644 = vld [vmem:[%s4 + $0x50] sm:$0xff]
      %v1645 = vld [vmem:[%s4 + $0x58] sm:$0xff]
      %v1646 = vld [vmem:[%s4 + $0x60] sm:$0xff]
      %v1647 = vld [vmem:[%s4 + $0x68] sm:$0xff]
      %v1648 = vld [vmem:[%s4 + $0x70] sm:$0xff]
      %v1649 = vld [vmem:[%s4 + $0x78] sm:$0xff]
      %v1650 = vld [vmem:[%s4 + $0x80] sm:$0xff]
      %v1651 = vld [vmem:[%s4 + $0x88] sm:$0xff]
      %v1652 = vld [vmem:[%s4 + $0x90] sm:$0xff]
      %v1653 = vld [vmem:[%s4 + $0x98] sm:$0xff]
      %v1654 = vld [vmem:[%s4 + $0xa0] sm:$0xff]
      %v1655 = vld [vmem:[%s4 + $0xa8] sm:$0xff]
      %v1656 = vld [vmem:[%s4 + $0xb0] sm:$0xff]
      %v1657 = vld [vmem:[%s4 + $0xb8] sm:$0xff]
      %v1658 = vld [vmem:[%s4 + $0xc0] sm:$0xff]
      %v1659 = vld [vmem:[%s4 + $0xc8] sm:$0xff]
      %v1660 = vld [vmem:[%s4 + $0xd0] sm:$0xff]
      %v1661 = vld [vmem:[%s4 + $0xd8] sm:$0xff]
      %v1662 = vld [vmem:[%s4 + $0xe0] sm:$0xff]
      %v1663 = vld [vmem:[%s4 + $0xe8] sm:$0xff]
      %v1664 = vld [vmem:[%s4 + $0xf0] sm:$0xff]
      %v1665 = vld [vmem:[%s4 + $0xf8] sm:$0xff]
      %v1698 = vunpack.c.l.b16 %v1634
      %v1699 = vunpack.c.h.b16 %v1634
      %v1700 = vunpack.c.l.b16 %v1635
      %v1701 = vunpack.c.h.b16 %v1635
      %v1702 = vunpack.c.l.b16 %v1636
      %v1703 = vunpack.c.h.b16 %v1636
      %v1704 = vunpack.c.l.b16 %v1637
      %v1705 = vunpack.c.h.b16 %v1637
      %v1706 = vunpack.c.l.b16 %v1638
      %v1707 = vunpack.c.h.b16 %v1638
      %v1708 = vunpack.c.l.b16 %v1639
      %v1709 = vunpack.c.h.b16 %v1639
      %v1710 = vunpack.c.l.b16 %v1640
      %v1711 = vunpack.c.h.b16 %v1640
      %v1712 = vunpack.c.l.b16 %v1641
      %v1713 = vunpack.c.h.b16 %v1641
      %v1714 = vunpack.c.l.b16 %v1642
      %v1715 = vunpack.c.h.b16 %v1642
      %v1716 = vunpack.c.l.b16 %v1643
      %v1717 = vunpack.c.h.b16 %v1643
      %v1718 = vunpack.c.l.b16 %v1644
      %v1719 = vunpack.c.h.b16 %v1644
      %v1720 = vunpack.c.l.b16 %v1645
      %v1721 = vunpack.c.h.b16 %v1645
      %v1722 = vunpack.c.l.b16 %v1646
      %v1723 = vunpack.c.h.b16 %v1646
      %v1724 = vunpack.c.l.b16 %v1647
      %v1725 = vunpack.c.h.b16 %v1647
      %v1726 = vunpack.c.l.b16 %v1648
      %v1727 = vunpack.c.h.b16 %v1648
      %v1728 = vunpack.c.l.b16 %v1649
      %v1729 = vunpack.c.h.b16 %v1649
      %v1730 = vunpack.c.l.b16 %v1650
      %v1731 = vunpack.c.h.b16 %v1650
      %v1732 = vunpack.c.l.b16 %v1651
      %v1733 = vunpack.c.h.b16 %v1651
      %v1734 = vunpack.c.l.b16 %v1652
      %v1735 = vunpack.c.h.b16 %v1652
      %v1736 = vunpack.c.l.b16 %v1653
      %v1737 = vunpack.c.h.b16 %v1653
      %v1738 = vunpack.c.l.b16 %v1654
      %v1739 = vunpack.c.h.b16 %v1654
      %v1740 = vunpack.c.l.b16 %v1655
      %v1741 = vunpack.c.h.b16 %v1655
      %v1742 = vunpack.c.l.b16 %v1656
      %v1743 = vunpack.c.h.b16 %v1656
      %v1744 = vunpack.c.l.b16 %v1657
      %v1745 = vunpack.c.h.b16 %v1657
      %v1746 = vunpack.c.l.b16 %v1658
      %v1747 = vunpack.c.h.b16 %v1658
      %v1748 = vunpack.c.l.b16 %v1659
      %v1749 = vunpack.c.h.b16 %v1659
      %v1750 = vunpack.c.l.b16 %v1660
      %v1751 = vunpack.c.h.b16 %v1660
      %v1752 = vunpack.c.l.b16 %v1661
      %v1753 = vunpack.c.h.b16 %v1661
      %v1754 = vunpack.c.l.b16 %v1662
      %v1755 = vunpack.c.h.b16 %v1662
      %v1756 = vunpack.c.l.b16 %v1663
      %v1757 = vunpack.c.h.b16 %v1663
      %v1758 = vunpack.c.l.b16 %v1664
      %v1759 = vunpack.c.h.b16 %v1664
      %v1760 = vunpack.c.l.b16 %v1665
      %v1761 = vunpack.c.h.b16 %v1665
      %v1762 = vpack.c.b16 %v1700, %v1698
      %v1763 = vpack.c.b16 %v1701, %v1699
      %v1764 = vpack.c.b16 %v1704, %v1702
      %v1765 = vpack.c.b16 %v1705, %v1703
      %v1766 = vpack.c.b16 %v1708, %v1706
      %v1767 = vpack.c.b16 %v1709, %v1707
      %v1768 = vpack.c.b16 %v1712, %v1710
      %v1769 = vpack.c.b16 %v1713, %v1711
      %v1770 = vpack.c.b16 %v1716, %v1714
      %v1771 = vpack.c.b16 %v1717, %v1715
      %v1772 = vpack.c.b16 %v1720, %v1718
      %v1773 = vpack.c.b16 %v1721, %v1719
      %v1774 = vpack.c.b16 %v1724, %v1722
      %v1775 = vpack.c.b16 %v1725, %v1723
      %v1776 = vpack.c.b16 %v1728, %v1726
      %v1777 = vpack.c.b16 %v1729, %v1727
      %v1778 = vpack.c.b16 %v1732, %v1730
      %v1779 = vpack.c.b16 %v1733, %v1731
      %v1780 = vpack.c.b16 %v1736, %v1734
      %v1781 = vpack.c.b16 %v1737, %v1735
      %v1782 = vpack.c.b16 %v1740, %v1738
      %v1783 = vpack.c.b16 %v1741, %v1739
      %v1784 = vpack.c.b16 %v1744, %v1742
      %v1785 = vpack.c.b16 %v1745, %v1743
      %v1786 = vpack.c.b16 %v1748, %v1746
      %v1787 = vpack.c.b16 %v1749, %v1747
      %v1788 = vpack.c.b16 %v1752, %v1750
      %v1789 = vpack.c.b16 %v1753, %v1751
      %v1790 = vpack.c.b16 %v1756, %v1754
      %v1791 = vpack.c.b16 %v1757, %v1755
      %v1792 = vpack.c.b16 %v1760, %v1758
      %v1793 = vpack.c.b16 %v1761, %v1759
      %1826 = vmatprep.subr.bf16.mxu0 %v1599
      %1827 = vmatpush1.bf16.msra.mxu0 %v1598
      %1828 = vmatprep.subr.bf16.mxu0 %v1595
      %1829 = vmatpush1.bf16.msra.mxu0 %v1594
      %1830 = vmatprep.subr.bf16.mxu0 %v1591
      %1831 = vmatpush1.bf16.msra.mxu0 %v1590
      %1832 = vmatprep.subr.bf16.mxu0 %v1587
      %1833 = vmatpush1.bf16.msra.mxu0 %v1586
      %1834 = vmatprep.subr.bf16.mxu0 %v1583
      %1835 = vmatpush1.bf16.msra.mxu0 %v1582
      %1836 = vmatprep.subr.bf16.mxu0 %v1579
      %1837 = vmatpush1.bf16.msra.mxu0 %v1578
      %1838 = vmatprep.subr.bf16.mxu0 %v1575
      %1839 = vmatpush1.bf16.msra.mxu0 %v1574
      %1840 = vmatprep.subr.bf16.mxu0 %v1571
      %1841 = vmatpush1.bf16.msra.mxu0 %v1570
      %1842 = vmatprep.subr.bf16.mxu0 %v1631
      %1843 = vmatpush2.bf16.msra.mxu0 %v1630
      %1844 = vmatprep.subr.bf16.mxu0 %v1627
      %1845 = vmatpush2.bf16.msra.mxu0 %v1626
      %1846 = vmatprep.subr.bf16.mxu0 %v1623
      %1847 = vmatpush2.bf16.msra.mxu0 %v1622
      %1848 = vmatprep.subr.bf16.mxu0 %v1619
      %1849 = vmatpush2.bf16.msra.mxu0 %v1618
      %1850 = vmatprep.subr.bf16.mxu0 %v1615
      %1851 = vmatpush2.bf16.msra.mxu0 %v1614
      %1852 = vmatprep.subr.bf16.mxu0 %v1611
      %1853 = vmatpush2.bf16.msra.mxu0 %v1610
      %1854 = vmatprep.subr.bf16.mxu0 %v1607
      %1855 = vmatpush2.bf16.msra.mxu0 %v1606
      %1856 = vmatprep.subr.bf16.mxu0 %v1603
      %1857 = vmatpush2.bf16.msra.mxu0 %v1602
      %1858 = vmatprep.mubr.bf16.mxu0 %v1763
      %1859 = vmatmul.mubr.bf16.gmra.mxu0 %v1762
      %v1860 = vpop.f32.mrf.mxu0
      %v1861 = vadd.f32 0.0, %v1860
      %v1862 = vpop.f32.mrf.mxu0
      %v1863 = vadd.f32 0.0, %v1862
      %v1864 = vpop.f32.mrf.mxu0
      %v1865 = vadd.f32 0.0, %v1864
      %v1866 = vpop.f32.mrf.mxu0
      %v1867 = vadd.f32 0.0, %v1866
      %1868 = vmatprep.mubr.bf16.mxu0 %v1765
      %1869 = vmatmul.mubr.bf16.gmra.mxu0 %v1764
      %v1870 = vpop.f32.mrf.mxu0
      %v1871 = vadd.f32 0.0, %v1870
      %v1872 = vpop.f32.mrf.mxu0
      %v1873 = vadd.f32 0.0, %v1872
      %v1874 = vpop.f32.mrf.mxu0
      %v1875 = vadd.f32 0.0, %v1874
      %v1876 = vpop.f32.mrf.mxu0
      %v1877 = vadd.f32 0.0, %v1876
      %1878 = vmatprep.mubr.bf16.mxu0 %v1767
      %1879 = vmatmul.mubr.bf16.gmra.mxu0 %v1766
      %v1880 = vpop.f32.mrf.mxu0
      %v1881 = vadd.f32 0.0, %v1880
      %v1882 = vpop.f32.mrf.mxu0
      %v1883 = vadd.f32 0.0, %v1882
      %v1884 = vpop.f32.mrf.mxu0
      %v1885 = vadd.f32 0.0, %v1884
      %v1886 = vpop.f32.mrf.mxu0
      %v1887 = vadd.f32 0.0, %v1886
      %1888 = vmatprep.mubr.bf16.mxu0 %v1769
      %1889 = vmatmul.mubr.bf16.gmra.mxu0 %v1768
      %v1890 = vpop.f32.mrf.mxu0
      %v1891 = vadd.f32 0.0, %v1890
      %v1892 = vpop.f32.mrf.mxu0
      %v1893 = vadd.f32 0.0, %v1892
      %v1894 = vpop.f32.mrf.mxu0
      %v1895 = vadd.f32 0.0, %v1894
      %v1896 = vpop.f32.mrf.mxu0
      %v1897 = vadd.f32 0.0, %v1896
      %1898 = vmatprep.mubr.bf16.mxu0 %v1771
      %1899 = vmatmul.mubr.bf16.gmra.mxu0 %v1770
      %v1900 = vpop.f32.mrf.mxu0
      %v1901 = vadd.f32 0.0, %v1900
      %v1902 = vpop.f32.mrf.mxu0
      %v1903 = vadd.f32 0.0, %v1902
      %v1904 = vpop.f32.mrf.mxu0
      %v1905 = vadd.f32 0.0, %v1904
      %v1906 = vpop.f32.mrf.mxu0
      %v1907 = vadd.f32 0.0, %v1906
      %1908 = vmatprep.mubr.bf16.mxu0 %v1773
      %1909 = vmatmul.mubr.bf16.gmra.mxu0 %v1772
      %v1910 = vpop.f32.mrf.mxu0
      %v1911 = vadd.f32 0.0, %v1910
      %v1912 = vpop.f32.mrf.mxu0
      %v1913 = vadd.f32 0.0, %v1912
      %v1914 = vpop.f32.mrf.mxu0
      %v1915 = vadd.f32 0.0, %v1914
      %v1916 = vpop.f32.mrf.mxu0
      %v1917 = vadd.f32 0.0, %v1916
      %1918 = vmatprep.mubr.bf16.mxu0 %v1775
      %1919 = vmatmul.mubr.bf16.gmra.mxu0 %v1774
      %v1920 = vpop.f32.mrf.mxu0
      %v1921 = vadd.f32 0.0, %v1920
      %v1922 = vpop.f32.mrf.mxu0
      %v1923 = vadd.f32 0.0, %v1922
      %v1924 = vpop.f32.mrf.mxu0
      %v1925 = vadd.f32 0.0, %v1924
      %v1926 = vpop.f32.mrf.mxu0
      %v1927 = vadd.f32 0.0, %v1926
      %1928 = vmatprep.mubr.bf16.mxu0 %v1777
      %1929 = vmatmul.mubr.bf16.gmra.mxu0 %v1776
      %v1930 = vpop.f32.mrf.mxu0
      %v1931 = vadd.f32 0.0, %v1930
      %v1932 = vpop.f32.mrf.mxu0
      %v1933 = vadd.f32 0.0, %v1932
      %v1934 = vpop.f32.mrf.mxu0
      %v1935 = vadd.f32 0.0, %v1934
      %v1936 = vpop.f32.mrf.mxu0
      %v1937 = vadd.f32 0.0, %v1936
      %1938 = vmatprep.mubr.bf16.mxu0 %v1779
      %1939 = vmatmul.mubr.bf16.gmra.mxu0 %v1778
      %v1940 = vpop.f32.mrf.mxu0
      %v1941 = vadd.f32 0.0, %v1940
      %v1942 = vpop.f32.mrf.mxu0
      %v1943 = vadd.f32 0.0, %v1942
      %v1944 = vpop.f32.mrf.mxu0
      %v1945 = vadd.f32 0.0, %v1944
      %v1946 = vpop.f32.mrf.mxu0
      %v1947 = vadd.f32 0.0, %v1946
      %1948 = vmatprep.mubr.bf16.mxu0 %v1781
      %1949 = vmatmul.mubr.bf16.gmra.mxu0 %v1780
      %v1950 = vpop.f32.mrf.mxu0
      %v1951 = vadd.f32 0.0, %v1950
      %v1952 = vpop.f32.mrf.mxu0
      %v1953 = vadd.f32 0.0, %v1952
      %v1954 = vpop.f32.mrf.mxu0
      %v1955 = vadd.f32 0.0, %v1954
      %v1956 = vpop.f32.mrf.mxu0
      %v1957 = vadd.f32 0.0, %v1956
      %1958 = vmatprep.mubr.bf16.mxu0 %v1783
      %1959 = vmatmul.mubr.bf16.gmra.mxu0 %v1782
      %v1960 = vpop.f32.mrf.mxu0
      %v1961 = vadd.f32 0.0, %v1960
      %v1962 = vpop.f32.mrf.mxu0
      %v1963 = vadd.f32 0.0, %v1962
      %v1964 = vpop.f32.mrf.mxu0
      %v1965 = vadd.f32 0.0, %v1964
      %v1966 = vpop.f32.mrf.mxu0
      %v1967 = vadd.f32 0.0, %v1966
      %1968 = vmatprep.mubr.bf16.mxu0 %v1785
      %1969 = vmatmul.mubr.bf16.gmra.mxu0 %v1784
      %v1970 = vpop.f32.mrf.mxu0
      %v1971 = vadd.f32 0.0, %v1970
      %v1972 = vpop.f32.mrf.mxu0
      %v1973 = vadd.f32 0.0, %v1972
      %v1974 = vpop.f32.mrf.mxu0
      %v1975 = vadd.f32 0.0, %v1974
      %v1976 = vpop.f32.mrf.mxu0
      %v1977 = vadd.f32 0.0, %v1976
      %1978 = vmatprep.mubr.bf16.mxu0 %v1787
      %1979 = vmatmul.mubr.bf16.gmra.mxu0 %v1786
      %v1980 = vpop.f32.mrf.mxu0
      %v1981 = vadd.f32 0.0, %v1980
      %v1982 = vpop.f32.mrf.mxu0
      %v1983 = vadd.f32 0.0, %v1982
      %v1984 = vpop.f32.mrf.mxu0
      %v1985 = vadd.f32 0.0, %v1984
      %v1986 = vpop.f32.mrf.mxu0
      %v1987 = vadd.f32 0.0, %v1986
      %1988 = vmatprep.mubr.bf16.mxu0 %v1789
      %1989 = vmatmul.mubr.bf16.gmra.mxu0 %v1788
      %v1990 = vpop.f32.mrf.mxu0
      %v1991 = vadd.f32 0.0, %v1990
      %v1992 = vpop.f32.mrf.mxu0
      %v1993 = vadd.f32 0.0, %v1992
      %v1994 = vpop.f32.mrf.mxu0
      %v1995 = vadd.f32 0.0, %v1994
      %v1996 = vpop.f32.mrf.mxu0
      %v1997 = vadd.f32 0.0, %v1996
      %1998 = vmatprep.mubr.bf16.mxu0 %v1791
      %1999 = vmatmul.mubr.bf16.gmra.mxu0 %v1790
      %v2000 = vpop.f32.mrf.mxu0
      %v2001 = vadd.f32 0.0, %v2000
      %v2002 = vpop.f32.mrf.mxu0
      %v2003 = vadd.f32 0.0, %v2002
      %v2004 = vpop.f32.mrf.mxu0
      %v2005 = vadd.f32 0.0, %v2004
      %v2006 = vpop.f32.mrf.mxu0
      %v2007 = vadd.f32 0.0, %v2006
      %2008 = vmatprep.mubr.bf16.mxu0 %v1793
      %2009 = vmatmul.mubr.bf16.gmra.mxu0 %v1792
      %v2010 = vpop.f32.mrf.mxu0
      %v2011 = vadd.f32 0.0, %v2010
      %v2012 = vpop.f32.mrf.mxu0
      %v2013 = vadd.f32 0.0, %v2012
      %v2014 = vpop.f32.mrf.mxu0
      %v2015 = vadd.f32 0.0, %v2014
      %v2016 = vpop.f32.mrf.mxu0
      %v2017 = vadd.f32 0.0, %v2016
      %2018 = vdwg.mxu0
      %2019 = vmatprep.subr.bf16.mxu0 %v1601
      %2020 = vmatpush1.bf16.msra.mxu0 %v1600
      %2021 = vmatprep.subr.bf16.mxu0 %v1597
      %2022 = vmatpush1.bf16.msra.mxu0 %v1596
      %2023 = vmatprep.subr.bf16.mxu0 %v1593
      %2024 = vmatpush1.bf16.msra.mxu0 %v1592
      %2025 = vmatprep.subr.bf16.mxu0 %v1589
      %2026 = vmatpush1.bf16.msra.mxu0 %v1588
      %2027 = vmatprep.subr.bf16.mxu0 %v1585
      %2028 = vmatpush1.bf16.msra.mxu0 %v1584
      %2029 = vmatprep.subr.bf16.mxu0 %v1581
      %2030 = vmatpush1.bf16.msra.mxu0 %v1580
      %2031 = vmatprep.subr.bf16.mxu0 %v1577
      %2032 = vmatpush1.bf16.msra.mxu0 %v1576
      %2033 = vmatprep.subr.bf16.mxu0 %v1573
      %2034 = vmatpush1.bf16.msra.mxu0 %v1572
      %2035 = vmatprep.subr.bf16.mxu0 %v1633
      %2036 = vmatpush2.bf16.msra.mxu0 %v1632
      %2037 = vmatprep.subr.bf16.mxu0 %v1629
      %2038 = vmatpush2.bf16.msra.mxu0 %v1628
      %2039 = vmatprep.subr.bf16.mxu0 %v1625
      %2040 = vmatpush2.bf16.msra.mxu0 %v1624
      %2041 = vmatprep.subr.bf16.mxu0 %v1621
      %2042 = vmatpush2.bf16.msra.mxu0 %v1620
      %2043 = vmatprep.subr.bf16.mxu0 %v1617
      %2044 = vmatpush2.bf16.msra.mxu0 %v1616
      %2045 = vmatprep.subr.bf16.mxu0 %v1613
      %2046 = vmatpush2.bf16.msra.mxu0 %v1612
      %2047 = vmatprep.subr.bf16.mxu0 %v1609
      %2048 = vmatpush2.bf16.msra.mxu0 %v1608
      %2049 = vmatprep.subr.bf16.mxu0 %v1605
      %2050 = vmatpush2.bf16.msra.mxu0 %v1604
      %2051 = vmatprep.mubr.bf16.mxu0 %v1763
      %2052 = vmatmul.mubr.bf16.gmra.mxu0 %v1762
      %v2053 = vpop.f32.mrf.mxu0
      %v2054 = vadd.f32 0.0, %v2053
      %v2055 = vpop.f32.mrf.mxu0
      %v2056 = vadd.f32 0.0, %v2055
      %v2057 = vpop.f32.mrf.mxu0
      %v2058 = vadd.f32 0.0, %v2057
      %v2059 = vpop.f32.mrf.mxu0
      %v2060 = vadd.f32 0.0, %v2059
      %2061 = vmatprep.mubr.bf16.mxu0 %v1765
      %2062 = vmatmul.mubr.bf16.gmra.mxu0 %v1764
      %v2063 = vpop.f32.mrf.mxu0
      %v2064 = vadd.f32 0.0, %v2063
      %v2065 = vpop.f32.mrf.mxu0
      %v2066 = vadd.f32 0.0, %v2065
      %v2067 = vpop.f32.mrf.mxu0
      %v2068 = vadd.f32 0.0, %v2067
      %v2069 = vpop.f32.mrf.mxu0
      %v2070 = vadd.f32 0.0, %v2069
      %2071 = vmatprep.mubr.bf16.mxu0 %v1767
      %2072 = vmatmul.mubr.bf16.gmra.mxu0 %v1766
      %v2073 = vpop.f32.mrf.mxu0
      %v2074 = vadd.f32 0.0, %v2073
      %v2075 = vpop.f32.mrf.mxu0
      %v2076 = vadd.f32 0.0, %v2075
      %v2077 = vpop.f32.mrf.mxu0
      %v2078 = vadd.f32 0.0, %v2077
      %v2079 = vpop.f32.mrf.mxu0
      %v2080 = vadd.f32 0.0, %v2079
      %2081 = vmatprep.mubr.bf16.mxu0 %v1769
      %2082 = vmatmul.mubr.bf16.gmra.mxu0 %v1768
      %v2083 = vpop.f32.mrf.mxu0
      %v2084 = vadd.f32 0.0, %v2083
      %v2085 = vpop.f32.mrf.mxu0
      %v2086 = vadd.f32 0.0, %v2085
      %v2087 = vpop.f32.mrf.mxu0
      %v2088 = vadd.f32 0.0, %v2087
      %v2089 = vpop.f32.mrf.mxu0
      %v2090 = vadd.f32 0.0, %v2089
      %2091 = vmatprep.mubr.bf16.mxu0 %v1771
      %2092 = vmatmul.mubr.bf16.gmra.mxu0 %v1770
      %v2093 = vpop.f32.mrf.mxu0
      %v2094 = vadd.f32 0.0, %v2093
      %v2095 = vpop.f32.mrf.mxu0
      %v2096 = vadd.f32 0.0, %v2095
      %v2097 = vpop.f32.mrf.mxu0
      %v2098 = vadd.f32 0.0, %v2097
      %v2099 = vpop.f32.mrf.mxu0
      %v2100 = vadd.f32 0.0, %v2099
      %2101 = vmatprep.mubr.bf16.mxu0 %v1773
      %2102 = vmatmul.mubr.bf16.gmra.mxu0 %v1772
      %v2103 = vpop.f32.mrf.mxu0
      %v2104 = vadd.f32 0.0, %v2103
      %v2105 = vpop.f32.mrf.mxu0
      %v2106 = vadd.f32 0.0, %v2105
      %v2107 = vpop.f32.mrf.mxu0
      %v2108 = vadd.f32 0.0, %v2107
      %v2109 = vpop.f32.mrf.mxu0
      %v2110 = vadd.f32 0.0, %v2109
      %2111 = vmatprep.mubr.bf16.mxu0 %v1775
      %2112 = vmatmul.mubr.bf16.gmra.mxu0 %v1774
      %v2113 = vpop.f32.mrf.mxu0
      %v2114 = vadd.f32 0.0, %v2113
      %v2115 = vpop.f32.mrf.mxu0
      %v2116 = vadd.f32 0.0, %v2115
      %v2117 = vpop.f32.mrf.mxu0
      %v2118 = vadd.f32 0.0, %v2117
      %v2119 = vpop.f32.mrf.mxu0
      %v2120 = vadd.f32 0.0, %v2119
      %2121 = vmatprep.mubr.bf16.mxu0 %v1777
      %2122 = vmatmul.mubr.bf16.gmra.mxu0 %v1776
      %v2123 = vpop.f32.mrf.mxu0
      %v2124 = vadd.f32 0.0, %v2123
      %v2125 = vpop.f32.mrf.mxu0
      %v2126 = vadd.f32 0.0, %v2125
      %v2127 = vpop.f32.mrf.mxu0
      %v2128 = vadd.f32 0.0, %v2127
      %v2129 = vpop.f32.mrf.mxu0
      %v2130 = vadd.f32 0.0, %v2129
      %2131 = vmatprep.mubr.bf16.mxu0 %v1779
      %2132 = vmatmul.mubr.bf16.gmra.mxu0 %v1778
      %v2133 = vpop.f32.mrf.mxu0
      %v2134 = vadd.f32 0.0, %v2133
      %v2135 = vpop.f32.mrf.mxu0
      %v2136 = vadd.f32 0.0, %v2135
      %v2137 = vpop.f32.mrf.mxu0
      %v2138 = vadd.f32 0.0, %v2137
      %v2139 = vpop.f32.mrf.mxu0
      %v2140 = vadd.f32 0.0, %v2139
      %2141 = vmatprep.mubr.bf16.mxu0 %v1781
      %2142 = vmatmul.mubr.bf16.gmra.mxu0 %v1780
      %v2143 = vpop.f32.mrf.mxu0
      %v2144 = vadd.f32 0.0, %v2143
      %v2145 = vpop.f32.mrf.mxu0
      %v2146 = vadd.f32 0.0, %v2145
      %v2147 = vpop.f32.mrf.mxu0
      %v2148 = vadd.f32 0.0, %v2147
      %v2149 = vpop.f32.mrf.mxu0
      %v2150 = vadd.f32 0.0, %v2149
      %2151 = vmatprep.mubr.bf16.mxu0 %v1783
      %2152 = vmatmul.mubr.bf16.gmra.mxu0 %v1782
      %v2153 = vpop.f32.mrf.mxu0
      %v2154 = vadd.f32 0.0, %v2153
      %v2155 = vpop.f32.mrf.mxu0
      %v2156 = vadd.f32 0.0, %v2155
      %v2157 = vpop.f32.mrf.mxu0
      %v2158 = vadd.f32 0.0, %v2157
      %v2159 = vpop.f32.mrf.mxu0
      %v2160 = vadd.f32 0.0, %v2159
      %2161 = vmatprep.mubr.bf16.mxu0 %v1785
      %2162 = vmatmul.mubr.bf16.gmra.mxu0 %v1784
      %v2163 = vpop.f32.mrf.mxu0
      %v2164 = vadd.f32 0.0, %v2163
      %v2165 = vpop.f32.mrf.mxu0
      %v2166 = vadd.f32 0.0, %v2165
      %v2167 = vpop.f32.mrf.mxu0
      %v2168 = vadd.f32 0.0, %v2167
      %v2169 = vpop.f32.mrf.mxu0
      %v2170 = vadd.f32 0.0, %v2169
      %2171 = vmatprep.mubr.bf16.mxu0 %v1787
      %2172 = vmatmul.mubr.bf16.gmra.mxu0 %v1786
      %v2173 = vpop.f32.mrf.mxu0
      %v2174 = vadd.f32 0.0, %v2173
      %v2175 = vpop.f32.mrf.mxu0
      %v2176 = vadd.f32 0.0, %v2175
      %v2177 = vpop.f32.mrf.mxu0
      %v2178 = vadd.f32 0.0, %v2177
      %v2179 = vpop.f32.mrf.mxu0
      %v2180 = vadd.f32 0.0, %v2179
      %2181 = vmatprep.mubr.bf16.mxu0 %v1789
      %2182 = vmatmul.mubr.bf16.gmra.mxu0 %v1788
      %v2183 = vpop.f32.mrf.mxu0
      %v2184 = vadd.f32 0.0, %v2183
      %v2185 = vpop.f32.mrf.mxu0
      %v2186 = vadd.f32 0.0, %v2185
      %v2187 = vpop.f32.mrf.mxu0
      %v2188 = vadd.f32 0.0, %v2187
      %v2189 = vpop.f32.mrf.mxu0
      %v2190 = vadd.f32 0.0, %v2189
      %2191 = vmatprep.mubr.bf16.mxu0 %v1791
      %2192 = vmatmul.mubr.bf16.gmra.mxu0 %v1790
      %v2193 = vpop.f32.mrf.mxu0
      %v2194 = vadd.f32 0.0, %v2193
      %v2195 = vpop.f32.mrf.mxu0
      %v2196 = vadd.f32 0.0, %v2195
      %v2197 = vpop.f32.mrf.mxu0
      %v2198 = vadd.f32 0.0, %v2197
      %v2199 = vpop.f32.mrf.mxu0
      %v2200 = vadd.f32 0.0, %v2199
      %2201 = vmatprep.mubr.bf16.mxu0 %v1793
      %2202 = vmatmul.mubr.bf16.gmra.mxu0 %v1792
      %v2203 = vpop.f32.mrf.mxu0
      %v2204 = vadd.f32 0.0, %v2203
      %v2205 = vpop.f32.mrf.mxu0
      %v2206 = vadd.f32 0.0, %v2205
      %v2207 = vpop.f32.mrf.mxu0
      %v2208 = vadd.f32 0.0, %v2207
      %v2209 = vpop.f32.mrf.mxu0
      %v2210 = vadd.f32 0.0, %v2209
      %2211 = vdwg.mxu0
      %v2212 = vmax.f32 %v1861, 0.0
      %v2213 = vmax.f32 %v1863, 0.0
      %v2214 = vmax.f32 %v2054, 0.0
      %v2215 = vmax.f32 %v2056, 0.0
      %v2216 = vmax.f32 %v1865, 0.0
      %v2217 = vmax.f32 %v1867, 0.0
      %v2218 = vmax.f32 %v2058, 0.0
      %v2219 = vmax.f32 %v2060, 0.0
      %v2220 = vmax.f32 %v1871, 0.0
      %v2221 = vmax.f32 %v1873, 0.0
      %v2222 = vmax.f32 %v2064, 0.0
      %v2223 = vmax.f32 %v2066, 0.0
      %v2224 = vmax.f32 %v1875, 0.0
      %v2225 = vmax.f32 %v1877, 0.0
      %v2226 = vmax.f32 %v2068, 0.0
      %v2227 = vmax.f32 %v2070, 0.0
      %v2228 = vmax.f32 %v1881, 0.0
      %v2229 = vmax.f32 %v1883, 0.0
      %v2230 = vmax.f32 %v2074, 0.0
      %v2231 = vmax.f32 %v2076, 0.0
      %v2232 = vmax.f32 %v1885, 0.0
      %v2233 = vmax.f32 %v1887, 0.0
      %v2234 = vmax.f32 %v2078, 0.0
      %v2235 = vmax.f32 %v2080, 0.0
      %v2236 = vmax.f32 %v1891, 0.0
      %v2237 = vmax.f32 %v1893, 0.0
      %v2238 = vmax.f32 %v2084, 0.0
      %v2239 = vmax.f32 %v2086, 0.0
      %v2240 = vmax.f32 %v1895, 0.0
      %v2241 = vmax.f32 %v1897, 0.0
      %v2242 = vmax.f32 %v2088, 0.0
      %v2243 = vmax.f32 %v2090, 0.0
      %v2244 = vmax.f32 %v1901, 0.0
      %v2245 = vmax.f32 %v1903, 0.0
      %v2246 = vmax.f32 %v2094, 0.0
      %v2247 = vmax.f32 %v2096, 0.0
      %v2248 = vmax.f32 %v1905, 0.0
      %v2249 = vmax.f32 %v1907, 0.0
      %v2250 = vmax.f32 %v2098, 0.0
      %v2251 = vmax.f32 %v2100, 0.0
      %v2252 = vmax.f32 %v1911, 0.0
      %v2253 = vmax.f32 %v1913, 0.0
      %v2254 = vmax.f32 %v2104, 0.0
      %v2255 = vmax.f32 %v2106, 0.0
      %v2256 = vmax.f32 %v1915, 0.0
      %v2257 = vmax.f32 %v1917, 0.0
      %v2258 = vmax.f32 %v2108, 0.0
      %v2259 = vmax.f32 %v2110, 0.0
      %v2260 = vmax.f32 %v1921, 0.0
      %v2261 = vmax.f32 %v1923, 0.0
      %v2262 = vmax.f32 %v2114, 0.0
      %v2263 = vmax.f32 %v2116, 0.0
      %v2264 = vmax.f32 %v1925, 0.0
      %v2265 = vmax.f32 %v1927, 0.0
      %v2266 = vmax.f32 %v2118, 0.0
      %v2267 = vmax.f32 %v2120, 0.0
      %v2268 = vmax.f32 %v1931, 0.0
      %v2269 = vmax.f32 %v1933, 0.0
      %v2270 = vmax.f32 %v2124, 0.0
      %v2271 = vmax.f32 %v2126, 0.0
      %v2272 = vmax.f32 %v1935, 0.0
      %v2273 = vmax.f32 %v1937, 0.0
      %v2274 = vmax.f32 %v2128, 0.0
      %v2275 = vmax.f32 %v2130, 0.0
      %v2276 = vmax.f32 %v1941, 0.0
      %v2277 = vmax.f32 %v1943, 0.0
      %v2278 = vmax.f32 %v2134, 0.0
      %v2279 = vmax.f32 %v2136, 0.0
      %v2280 = vmax.f32 %v1945, 0.0
      %v2281 = vmax.f32 %v1947, 0.0
      %v2282 = vmax.f32 %v2138, 0.0
      %v2283 = vmax.f32 %v2140, 0.0
      %v2284 = vmax.f32 %v1951, 0.0
      %v2285 = vmax.f32 %v1953, 0.0
      %v2286 = vmax.f32 %v2144, 0.0
      %v2287 = vmax.f32 %v2146, 0.0
      %v2288 = vmax.f32 %v1955, 0.0
      %v2289 = vmax.f32 %v1957, 0.0
      %v2290 = vmax.f32 %v2148, 0.0
      %v2291 = vmax.f32 %v2150, 0.0
      %v2292 = vmax.f32 %v1961, 0.0
      %v2293 = vmax.f32 %v1963, 0.0
      %v2294 = vmax.f32 %v2154, 0.0
      %v2295 = vmax.f32 %v2156, 0.0
      %v2296 = vmax.f32 %v1965, 0.0
      %v2297 = vmax.f32 %v1967, 0.0
      %v2298 = vmax.f32 %v2158, 0.0
      %v2299 = vmax.f32 %v2160, 0.0
      %v2300 = vmax.f32 %v1971, 0.0
      %v2301 = vmax.f32 %v1973, 0.0
      %v2302 = vmax.f32 %v2164, 0.0
      %v2303 = vmax.f32 %v2166, 0.0
      %v2304 = vmax.f32 %v1975, 0.0
      %v2305 = vmax.f32 %v1977, 0.0
      %v2306 = vmax.f32 %v2168, 0.0
      %v2307 = vmax.f32 %v2170, 0.0
      %v2308 = vmax.f32 %v1981, 0.0
      %v2309 = vmax.f32 %v1983, 0.0
      %v2310 = vmax.f32 %v2174, 0.0
      %v2311 = vmax.f32 %v2176, 0.0
      %v2312 = vmax.f32 %v1985, 0.0
      %v2313 = vmax.f32 %v1987, 0.0
      %v2314 = vmax.f32 %v2178, 0.0
      %v2315 = vmax.f32 %v2180, 0.0
      %v2316 = vmax.f32 %v1991, 0.0
      %v2317 = vmax.f32 %v1993, 0.0
      %v2318 = vmax.f32 %v2184, 0.0
      %v2319 = vmax.f32 %v2186, 0.0
      %v2320 = vmax.f32 %v1995, 0.0
      %v2321 = vmax.f32 %v1997, 0.0
      %v2322 = vmax.f32 %v2188, 0.0
      %v2323 = vmax.f32 %v2190, 0.0
      %v2324 = vmax.f32 %v2001, 0.0
      %v2325 = vmax.f32 %v2003, 0.0
      %v2326 = vmax.f32 %v2194, 0.0
      %v2327 = vmax.f32 %v2196, 0.0
      %v2328 = vmax.f32 %v2005, 0.0
      %v2329 = vmax.f32 %v2007, 0.0
      %v2330 = vmax.f32 %v2198, 0.0
      %v2331 = vmax.f32 %v2200, 0.0
      %v2332 = vmax.f32 %v2011, 0.0
      %v2333 = vmax.f32 %v2013, 0.0
      %v2334 = vmax.f32 %v2204, 0.0
      %v2335 = vmax.f32 %v2206, 0.0
      %v2336 = vmax.f32 %v2015, 0.0
      %v2337 = vmax.f32 %v2017, 0.0
      %v2338 = vmax.f32 %v2208, 0.0
      %v2339 = vmax.f32 %v2210, 0.0
      %v2340 = vpack.c.bf16 %v2216, %v2212
      %v2341 = vpack.c.bf16 %v2217, %v2213
      %v2342 = vpack.c.bf16 %v2218, %v2214
      %v2343 = vpack.c.bf16 %v2219, %v2215
      %v2344 = vpack.c.bf16 %v2224, %v2220
      %v2345 = vpack.c.bf16 %v2225, %v2221
      %v2346 = vpack.c.bf16 %v2226, %v2222
      %v2347 = vpack.c.bf16 %v2227, %v2223
      %v2348 = vpack.c.bf16 %v2232, %v2228
      %v2349 = vpack.c.bf16 %v2233, %v2229
      %v2350 = vpack.c.bf16 %v2234, %v2230
      %v2351 = vpack.c.bf16 %v2235, %v2231
      %v2352 = vpack.c.bf16 %v2240, %v2236
      %v2353 = vpack.c.bf16 %v2241, %v2237
      %v2354 = vpack.c.bf16 %v2242, %v2238
      %v2355 = vpack.c.bf16 %v2243, %v2239
      %v2356 = vpack.c.bf16 %v2248, %v2244
      %v2357 = vpack.c.bf16 %v2249, %v2245
      %v2358 = vpack.c.bf16 %v2250, %v2246
      %v2359 = vpack.c.bf16 %v2251, %v2247
      %v2360 = vpack.c.bf16 %v2256, %v2252
      %v2361 = vpack.c.bf16 %v2257, %v2253
      %v2362 = vpack.c.bf16 %v2258, %v2254
      %v2363 = vpack.c.bf16 %v2259, %v2255
      %v2364 = vpack.c.bf16 %v2264, %v2260
      %v2365 = vpack.c.bf16 %v2265, %v2261
      %v2366 = vpack.c.bf16 %v2266, %v2262
      %v2367 = vpack.c.bf16 %v2267, %v2263
      %v2368 = vpack.c.bf16 %v2272, %v2268
      %v2369 = vpack.c.bf16 %v2273, %v2269
      %v2370 = vpack.c.bf16 %v2274, %v2270
      %v2371 = vpack.c.bf16 %v2275, %v2271
      %v2372 = vpack.c.bf16 %v2280, %v2276
      %v2373 = vpack.c.bf16 %v2281, %v2277
      %v2374 = vpack.c.bf16 %v2282, %v2278
      %v2375 = vpack.c.bf16 %v2283, %v2279
      %v2376 = vpack.c.bf16 %v2288, %v2284
      %v2377 = vpack.c.bf16 %v2289, %v2285
      %v2378 = vpack.c.bf16 %v2290, %v2286
      %v2379 = vpack.c.bf16 %v2291, %v2287
      %v2380 = vpack.c.bf16 %v2296, %v2292
      %v2381 = vpack.c.bf16 %v2297, %v2293
      %v2382 = vpack.c.bf16 %v2298, %v2294
      %v2383 = vpack.c.bf16 %v2299, %v2295
      %v2384 = vpack.c.bf16 %v2304, %v2300
      %v2385 = vpack.c.bf16 %v2305, %v2301
      %v2386 = vpack.c.bf16 %v2306, %v2302
      %v2387 = vpack.c.bf16 %v2307, %v2303
      %v2388 = vpack.c.bf16 %v2312, %v2308
      %v2389 = vpack.c.bf16 %v2313, %v2309
      %v2390 = vpack.c.bf16 %v2314, %v2310
      %v2391 = vpack.c.bf16 %v2315, %v2311
      %v2392 = vpack.c.bf16 %v2320, %v2316
      %v2393 = vpack.c.bf16 %v2321, %v2317
      %v2394 = vpack.c.bf16 %v2322, %v2318
      %v2395 = vpack.c.bf16 %v2323, %v2319
      %v2396 = vpack.c.bf16 %v2328, %v2324
      %v2397 = vpack.c.bf16 %v2329, %v2325
      %v2398 = vpack.c.bf16 %v2330, %v2326
      %v2399 = vpack.c.bf16 %v2331, %v2327
      %v2400 = vpack.c.bf16 %v2336, %v2332
      %v2401 = vpack.c.bf16 %v2337, %v2333
      %v2402 = vpack.c.bf16 %v2338, %v2334
      %v2403 = vpack.c.bf16 %v2339, %v2335
      %v2468 = vunpack.c.l.b16 %v2340
      %v2469 = vunpack.c.l.b16 %v2341
      %v2470 = vunpack.c.l.b16 %v2342
      %v2471 = vunpack.c.l.b16 %v2343
      %v2472 = vunpack.c.h.b16 %v2340
      %v2473 = vunpack.c.h.b16 %v2341
      %v2474 = vunpack.c.h.b16 %v2342
      %v2475 = vunpack.c.h.b16 %v2343
      %v2476 = vunpack.c.l.b16 %v2344
      %v2477 = vunpack.c.l.b16 %v2345
      %v2478 = vunpack.c.l.b16 %v2346
      %v2479 = vunpack.c.l.b16 %v2347
      %v2480 = vunpack.c.h.b16 %v2344
      %v2481 = vunpack.c.h.b16 %v2345
      %v2482 = vunpack.c.h.b16 %v2346
      %v2483 = vunpack.c.h.b16 %v2347
      %v2484 = vunpack.c.l.b16 %v2348
      %v2485 = vunpack.c.l.b16 %v2349
      %v2486 = vunpack.c.l.b16 %v2350
      %v2487 = vunpack.c.l.b16 %v2351
      %v2488 = vunpack.c.h.b16 %v2348
      %v2489 = vunpack.c.h.b16 %v2349
      %v2490 = vunpack.c.h.b16 %v2350
      %v2491 = vunpack.c.h.b16 %v2351
      %v2492 = vunpack.c.l.b16 %v2352
      %v2493 = vunpack.c.l.b16 %v2353
      %v2494 = vunpack.c.l.b16 %v2354
      %v2495 = vunpack.c.l.b16 %v2355
      %v2496 = vunpack.c.h.b16 %v2352
      %v2497 = vunpack.c.h.b16 %v2353
      %v2498 = vunpack.c.h.b16 %v2354
      %v2499 = vunpack.c.h.b16 %v2355
      %v2500 = vunpack.c.l.b16 %v2356
      %v2501 = vunpack.c.l.b16 %v2357
      %v2502 = vunpack.c.l.b16 %v2358
      %v2503 = vunpack.c.l.b16 %v2359
      %v2504 = vunpack.c.h.b16 %v2356
      %v2505 = vunpack.c.h.b16 %v2357
      %v2506 = vunpack.c.h.b16 %v2358
      %v2507 = vunpack.c.h.b16 %v2359
      %v2508 = vunpack.c.l.b16 %v2360
      %v2509 = vunpack.c.l.b16 %v2361
      %v2510 = vunpack.c.l.b16 %v2362
      %v2511 = vunpack.c.l.b16 %v2363
      %v2512 = vunpack.c.h.b16 %v2360
      %v2513 = vunpack.c.h.b16 %v2361
      %v2514 = vunpack.c.h.b16 %v2362
      %v2515 = vunpack.c.h.b16 %v2363
      %v2516 = vunpack.c.l.b16 %v2364
      %v2517 = vunpack.c.l.b16 %v2365
      %v2518 = vunpack.c.l.b16 %v2366
      %v2519 = vunpack.c.l.b16 %v2367
      %v2520 = vunpack.c.h.b16 %v2364
      %v2521 = vunpack.c.h.b16 %v2365
      %v2522 = vunpack.c.h.b16 %v2366
      %v2523 = vunpack.c.h.b16 %v2367
      %v2524 = vunpack.c.l.b16 %v2368
      %v2525 = vunpack.c.l.b16 %v2369
      %v2526 = vunpack.c.l.b16 %v2370
      %v2527 = vunpack.c.l.b16 %v2371
      %v2528 = vunpack.c.h.b16 %v2368
      %v2529 = vunpack.c.h.b16 %v2369
      %v2530 = vunpack.c.h.b16 %v2370
      %v2531 = vunpack.c.h.b16 %v2371
      %v2532 = vunpack.c.l.b16 %v2372
      %v2533 = vunpack.c.l.b16 %v2373
      %v2534 = vunpack.c.l.b16 %v2374
      %v2535 = vunpack.c.l.b16 %v2375
      %v2536 = vunpack.c.h.b16 %v2372
      %v2537 = vunpack.c.h.b16 %v2373
      %v2538 = vunpack.c.h.b16 %v2374
      %v2539 = vunpack.c.h.b16 %v2375
      %v2540 = vunpack.c.l.b16 %v2376
      %v2541 = vunpack.c.l.b16 %v2377
      %v2542 = vunpack.c.l.b16 %v2378
      %v2543 = vunpack.c.l.b16 %v2379
      %v2544 = vunpack.c.h.b16 %v2376
      %v2545 = vunpack.c.h.b16 %v2377
      %v2546 = vunpack.c.h.b16 %v2378
      %v2547 = vunpack.c.h.b16 %v2379
      %v2548 = vunpack.c.l.b16 %v2380
      %v2549 = vunpack.c.l.b16 %v2381
      %v2550 = vunpack.c.l.b16 %v2382
      %v2551 = vunpack.c.l.b16 %v2383
      %v2552 = vunpack.c.h.b16 %v2380
      %v2553 = vunpack.c.h.b16 %v2381
      %v2554 = vunpack.c.h.b16 %v2382
      %v2555 = vunpack.c.h.b16 %v2383
      %v2556 = vunpack.c.l.b16 %v2384
      %v2557 = vunpack.c.l.b16 %v2385
      %v2558 = vunpack.c.l.b16 %v2386
      %v2559 = vunpack.c.l.b16 %v2387
      %v2560 = vunpack.c.h.b16 %v2384
      %v2561 = vunpack.c.h.b16 %v2385
      %v2562 = vunpack.c.h.b16 %v2386
      %v2563 = vunpack.c.h.b16 %v2387
      %v2564 = vunpack.c.l.b16 %v2388
      %v2565 = vunpack.c.l.b16 %v2389
      %v2566 = vunpack.c.l.b16 %v2390
      %v2567 = vunpack.c.l.b16 %v2391
      %v2568 = vunpack.c.h.b16 %v2388
      %v2569 = vunpack.c.h.b16 %v2389
      %v2570 = vunpack.c.h.b16 %v2390
      %v2571 = vunpack.c.h.b16 %v2391
      %v2572 = vunpack.c.l.b16 %v2392
      %v2573 = vunpack.c.l.b16 %v2393
      %v2574 = vunpack.c.l.b16 %v2394
      %v2575 = vunpack.c.l.b16 %v2395
      %v2576 = vunpack.c.h.b16 %v2392
      %v2577 = vunpack.c.h.b16 %v2393
      %v2578 = vunpack.c.h.b16 %v2394
      %v2579 = vunpack.c.h.b16 %v2395
      %v2580 = vunpack.c.l.b16 %v2396
      %v2581 = vunpack.c.l.b16 %v2397
      %v2582 = vunpack.c.l.b16 %v2398
      %v2583 = vunpack.c.l.b16 %v2399
      %v2584 = vunpack.c.h.b16 %v2396
      %v2585 = vunpack.c.h.b16 %v2397
      %v2586 = vunpack.c.h.b16 %v2398
      %v2587 = vunpack.c.h.b16 %v2399
      %v2588 = vunpack.c.l.b16 %v2400
      %v2589 = vunpack.c.l.b16 %v2401
      %v2590 = vunpack.c.l.b16 %v2402
      %v2591 = vunpack.c.l.b16 %v2403
      %v2592 = vunpack.c.h.b16 %v2400
      %v2593 = vunpack.c.h.b16 %v2401
      %v2594 = vunpack.c.h.b16 %v2402
      %v2595 = vunpack.c.h.b16 %v2403
      %v2596 = vpack.c.b16 %v2469, %v2468
      %v2597 = vpack.c.b16 %v2471, %v2470
      %v2598 = vpack.c.b16 %v2473, %v2472
      %v2599 = vpack.c.b16 %v2475, %v2474
      %v2600 = vpack.c.b16 %v2477, %v2476
      %v2601 = vpack.c.b16 %v2479, %v2478
      %v2602 = vpack.c.b16 %v2481, %v2480
      %v2603 = vpack.c.b16 %v2483, %v2482
      %v2604 = vpack.c.b16 %v2485, %v2484
      %v2605 = vpack.c.b16 %v2487, %v2486
      %v2606 = vpack.c.b16 %v2489, %v2488
      %v2607 = vpack.c.b16 %v2491, %v2490
      %v2608 = vpack.c.b16 %v2493, %v2492
      %v2609 = vpack.c.b16 %v2495, %v2494
      %v2610 = vpack.c.b16 %v2497, %v2496
      %v2611 = vpack.c.b16 %v2499, %v2498
      %v2612 = vpack.c.b16 %v2501, %v2500
      %v2613 = vpack.c.b16 %v2503, %v2502
      %v2614 = vpack.c.b16 %v2505, %v2504
      %v2615 = vpack.c.b16 %v2507, %v2506
      %v2616 = vpack.c.b16 %v2509, %v2508
      %v2617 = vpack.c.b16 %v2511, %v2510
      %v2618 = vpack.c.b16 %v2513, %v2512
      %v2619 = vpack.c.b16 %v2515, %v2514
      %v2620 = vpack.c.b16 %v2517, %v2516
      %v2621 = vpack.c.b16 %v2519, %v2518
      %v2622 = vpack.c.b16 %v2521, %v2520
      %v2623 = vpack.c.b16 %v2523, %v2522
      %v2624 = vpack.c.b16 %v2525, %v2524
      %v2625 = vpack.c.b16 %v2527, %v2526
      %v2626 = vpack.c.b16 %v2529, %v2528
      %v2627 = vpack.c.b16 %v2531, %v2530
      %v2628 = vpack.c.b16 %v2533, %v2532
      %v2629 = vpack.c.b16 %v2535, %v2534
      %v2630 = vpack.c.b16 %v2537, %v2536
      %v2631 = vpack.c.b16 %v2539, %v2538
      %v2632 = vpack.c.b16 %v2541, %v2540
      %v2633 = vpack.c.b16 %v2543, %v2542
      %v2634 = vpack.c.b16 %v2545, %v2544
      %v2635 = vpack.c.b16 %v2547, %v2546
      %v2636 = vpack.c.b16 %v2549, %v2548
      %v2637 = vpack.c.b16 %v2551, %v2550
      %v2638 = vpack.c.b16 %v2553, %v2552
      %v2639 = vpack.c.b16 %v2555, %v2554
      %v2640 = vpack.c.b16 %v2557, %v2556
      %v2641 = vpack.c.b16 %v2559, %v2558
      %v2642 = vpack.c.b16 %v2561, %v2560
      %v2643 = vpack.c.b16 %v2563, %v2562
      %v2644 = vpack.c.b16 %v2565, %v2564
      %v2645 = vpack.c.b16 %v2567, %v2566
      %v2646 = vpack.c.b16 %v2569, %v2568
      %v2647 = vpack.c.b16 %v2571, %v2570
      %v2648 = vpack.c.b16 %v2573, %v2572
      %v2649 = vpack.c.b16 %v2575, %v2574
      %v2650 = vpack.c.b16 %v2577, %v2576
      %v2651 = vpack.c.b16 %v2579, %v2578
      %v2652 = vpack.c.b16 %v2581, %v2580
      %v2653 = vpack.c.b16 %v2583, %v2582
      %v2654 = vpack.c.b16 %v2585, %v2584
      %v2655 = vpack.c.b16 %v2587, %v2586
      %v2656 = vpack.c.b16 %v2589, %v2588
      %v2657 = vpack.c.b16 %v2591, %v2590
      %v2658 = vpack.c.b16 %v2593, %v2592
      %v2659 = vpack.c.b16 %v2595, %v2594
      %2724 = vst [vmem:[%s262] sm:$0xff] %v2596
      %2725 = vst [vmem:[%s262 + $0x8] sm:$0xff] %v2597
      %2726 = vst [vmem:[%s262 + $0x10] sm:$0xff] %v2598
      %2727 = vst [vmem:[%s262 + $0x18] sm:$0xff] %v2599
      %2728 = vst [vmem:[%s262 + $0x20] sm:$0xff] %v2600
      %2729 = vst [vmem:[%s262 + $0x28] sm:$0xff] %v2601
      %2730 = vst [vmem:[%s262 + $0x30] sm:$0xff] %v2602
      %2731 = vst [vmem:[%s262 + $0x38] sm:$0xff] %v2603
      %2732 = vst [vmem:[%s262 + $0x40] sm:$0xff] %v2604
      %2733 = vst [vmem:[%s262 + $0x48] sm:$0xff] %v2605
      %2734 = vst [vmem:[%s262 + $0x50] sm:$0xff] %v2606
      %2735 = vst [vmem:[%s262 + $0x58] sm:$0xff] %v2607
      %2736 = vst [vmem:[%s262 + $0x60] sm:$0xff] %v2608
      %2737 = vst [vmem:[%s262 + $0x68] sm:$0xff] %v2609
      %2738 = vst [vmem:[%s262 + $0x70] sm:$0xff] %v2610
      %2739 = vst [vmem:[%s262 + $0x78] sm:$0xff] %v2611
      %2740 = vst [vmem:[%s262 + $0x80] sm:$0xff] %v2612
      %2741 = vst [vmem:[%s262 + $0x88] sm:$0xff] %v2613
      %2742 = vst [vmem:[%s262 + $0x90] sm:$0xff] %v2614
      %2743 = vst [vmem:[%s262 + $0x98] sm:$0xff] %v2615
      %2744 = vst [vmem:[%s262 + $0xa0] sm:$0xff] %v2616
      %2745 = vst [vmem:[%s262 + $0xa8] sm:$0xff] %v2617
      %2746 = vst [vmem:[%s262 + $0xb0] sm:$0xff] %v2618
      %2747 = vst [vmem:[%s262 + $0xb8] sm:$0xff] %v2619
      %2748 = vst [vmem:[%s262 + $0xc0] sm:$0xff] %v2620
      %2749 = vst [vmem:[%s262 + $0xc8] sm:$0xff] %v2621
      %2750 = vst [vmem:[%s262 + $0xd0] sm:$0xff] %v2622
      %2751 = vst [vmem:[%s262 + $0xd8] sm:$0xff] %v2623
      %2752 = vst [vmem:[%s262 + $0xe0] sm:$0xff] %v2624
      %2753 = vst [vmem:[%s262 + $0xe8] sm:$0xff] %v2625
      %2754 = vst [vmem:[%s262 + $0xf0] sm:$0xff] %v2626
      %2755 = vst [vmem:[%s262 + $0xf8] sm:$0xff] %v2627
      %2756 = vst [vmem:[%s262 + $0x100] sm:$0xff] %v2628
      %2757 = vst [vmem:[%s262 + $0x108] sm:$0xff] %v2629
      %2758 = vst [vmem:[%s262 + $0x110] sm:$0xff] %v2630
      %2759 = vst [vmem:[%s262 + $0x118] sm:$0xff] %v2631
      %2760 = vst [vmem:[%s262 + $0x120] sm:$0xff] %v2632
      %2761 = vst [vmem:[%s262 + $0x128] sm:$0xff] %v2633
      %2762 = vst [vmem:[%s262 + $0x130] sm:$0xff] %v2634
      %2763 = vst [vmem:[%s262 + $0x138] sm:$0xff] %v2635
      %2764 = vst [vmem:[%s262 + $0x140] sm:$0xff] %v2636
      %2765 = vst [vmem:[%s262 + $0x148] sm:$0xff] %v2637
      %2766 = vst [vmem:[%s262 + $0x150] sm:$0xff] %v2638
      %2767 = vst [vmem:[%s262 + $0x158] sm:$0xff] %v2639
      %2768 = vst [vmem:[%s262 + $0x160] sm:$0xff] %v2640
      %2769 = vst [vmem:[%s262 + $0x168] sm:$0xff] %v2641
      %2770 = vst [vmem:[%s262 + $0x170] sm:$0xff] %v2642
      %2771 = vst [vmem:[%s262 + $0x178] sm:$0xff] %v2643
      %2772 = vst [vmem:[%s262 + $0x180] sm:$0xff] %v2644
      %2773 = vst [vmem:[%s262 + $0x188] sm:$0xff] %v2645
      %2774 = vst [vmem:[%s262 + $0x190] sm:$0xff] %v2646
      %2775 = vst [vmem:[%s262 + $0x198] sm:$0xff] %v2647
      %2776 = vst [vmem:[%s262 + $0x1a0] sm:$0xff] %v2648
      %2777 = vst [vmem:[%s262 + $0x1a8] sm:$0xff] %v2649
      %2778 = vst [vmem:[%s262 + $0x1b0] sm:$0xff] %v2650
      %2779 = vst [vmem:[%s262 + $0x1b8] sm:$0xff] %v2651
      %2780 = vst [vmem:[%s262 + $0x1c0] sm:$0xff] %v2652
      %2781 = vst [vmem:[%s262 + $0x1c8] sm:$0xff] %v2653
      %2782 = vst [vmem:[%s262 + $0x1d0] sm:$0xff] %v2654
      %2783 = vst [vmem:[%s262 + $0x1d8] sm:$0xff] %v2655
      %2784 = vst [vmem:[%s262 + $0x1e0] sm:$0xff] %v2656
      %2785 = vst [vmem:[%s262 + $0x1e8] sm:$0xff] %v2657
      %2786 = vst [vmem:[%s262 + $0x1f0] sm:$0xff] %v2658
      %2787 = vst [vmem:[%s262 + $0x1f8] sm:$0xff] %v2659
      %s2788 = smul.u32 4, %s21
      %p2789 = scmp.lt.s32.totalorder %s20, 1
      %s2790 = scalar_select %p2789, %s20, 1
      %p2791 = scmp.lt.s32.totalorder %s2788, 3
      %s2792 = scalar_select %p2791, %s2788, 3
      %s2793 = smul.addr %s2790, 128
      %s2794 = sadd.s32 %s2792, %s2793
      %s2795 = smul.addr %s2794, 4
      %s2796 = scalar_lea.vmem %s5, %s2795
      // Predicated region
      $region41: #{forward.1} parent=39 // pred_check
        %p2797 = pneg %p160
      $region42: #{forward.1} parent=39 // pred_check_branch
        %2799 = sbr.rel (%p2797) target = $region44
      $region43: #{forward.1} parent=39 // pred_region
        %s2800 = smul.u32 4, %s21
      $region44: #{forward.1} parent=39 // pred_fallthru
        _
    $region40: #{forward.1} parent=5 // pred_fallthru
      _
    %p2801 = scmp.le.s32.totalorder 2, %s11
    // Predicated region
    $region45: #{forward.1} parent=5 // pred_check
      %p2802 = pneg %p2801
    $region46: #{forward.1} parent=5 // pred_check_branch
      %2804 = sbr.rel (%p2802) target = $region48
    $region47: #{forward.1} parent=5 // pred_region
      %s2805 = ssub.s32 %s11, 2
      // Predicated region
      $region49: #{forward.1} parent=47 // pred_check
        %p2806 = pneg %p166
      $region50: #{forward.1} parent=47 // pred_check_branch
        %2808 = sbr.rel (%p2806) target = $region52
      $region51: #{forward.1} parent=47 // pred_region
        %s2809 = smul.u32 4, %s23
        %p2810 = scmp.lt.s32.totalorder %s22, 1
        %s2811 = scalar_select %p2810, %s22, 1
        %p2812 = scmp.lt.s32.totalorder %s2809, 3
        %s2813 = scalar_select %p2812, %s2809, 3
        %s2814 = smul.addr %s2811, 128
        %s2815 = sadd.s32 %s2813, %s2814
        %s2816 = smul.addr %s2815, 4
        %s2817 = scalar_lea.vmem %s5, %s2816
      $region52: #{forward.1} parent=47 // pred_fallthru
        _
    $region48: #{forward.1} parent=5 // pred_fallthru
      _
  $region6: #{forward.1} parent=0 // loop_footer
    %s15 = sadd.s32 1, %s11
  $region7: #{forward.1} parent=0 // loop_footer_branch
    %10 = sbr.rel target = $region3
  $region8: #{forward.1} parent=0 // loop_exit
    _

</llo_original>
